<compile_context>
chip_gen: v6e
topology: v6e:2x2x1
jax: 0.10.0
libtpu: 0.0.40
codegen_flags: <defaults>
</compile_context>

<pallas_src>
import functools

import jax
import jax.numpy as jnp
import numpy as np
from jax.experimental import pallas as pl
from jax.experimental.pallas import tpu as pltpu

# ----------------------------- hyper-parameters -----------------------------
SIGMA_DATA = 0.5
SIGMA_MIN = 0.001
SIGMA_MAX = 80.0
RHO = 7.0
NUM_SAMPLING_STEPS = 4          # number of Euler steps (len(sigmas) - 1)

B = 2                           # batch
T = 8                           # window / sequence length
ACTION_DIM = 8
PERCEPTUAL_EMB_DIM = 32
LATENT_GOAL_DIM = 32
LATENT_PLAN_DIM = 32
COND_DIM = PERCEPTUAL_EMB_DIM + LATENT_GOAL_DIM + LATENT_PLAN_DIM
HIDDEN = 64
M = B * T                       # rows processed by the kernel


# ------------------ baked Karras / Euler schedule constants ------------------
def _karras_sigmas_np(n, sigma_min, sigma_max, rho):
    ramp = np.linspace(0.0, 1.0, n)
    min_inv_rho = sigma_min ** (1.0 / rho)
    max_inv_rho = sigma_max ** (1.0 / rho)
    sig = (max_inv_rho + ramp * (min_inv_rho - max_inv_rho)) ** rho
    return np.concatenate([sig, np.zeros((1,))])


_SIG = _karras_sigmas_np(NUM_SAMPLING_STEPS, SIGMA_MIN, SIGMA_MAX, RHO)
_S, _SN = _SIG[:-1], _SIG[1:]
_DENOM = _S * _S + SIGMA_DATA * SIGMA_DATA
_C_SKIP = (SIGMA_DATA * SIGMA_DATA) / _DENOM
_C_OUT = _S * SIGMA_DATA / np.sqrt(_DENOM)
_RATIO = (_SN - _S) / _S                                  # dt / sigma
# Per-step compile-time constants consumed by the unrolled kernel loop:
#   x_{i+1} = ALPHA_i * x + BETA_i * (inner + b2),  inner = MLP2(h)
C_IN = tuple(float(v) for v in 1.0 / np.sqrt(_DENOM))
C_NOISE = tuple(float(v) for v in 0.25 * np.log(_S))
ALPHA = tuple(float(v) for v in 1.0 + _RATIO * (1.0 - _C_SKIP))
BETA = tuple(float(v) for v in -_RATIO * _C_OUT)


# --------------------------------- kernel -----------------------------------
def _euler_sample_kernel(pe_ref,        # VMEM (M, PERCEPTUAL_EMB_DIM)
                         goal_ref,      # VMEM (B, LATENT_GOAL_DIM)
                         plan_ref,      # VMEM (B, LATENT_PLAN_DIM)
                         noise_ref,     # VMEM (M, ACTION_DIM)   N(0,1) noise
                         w1c_ref,       # VMEM (COND_DIM, HIDDEN)
                         w1x_ref,       # VMEM (ACTION_DIM, HIDDEN)
                         w1s_ref,       # VMEM (1, HIDDEN)  sigma-embedding
                         b1_ref,        # VMEM (1, HIDDEN)
                         w2_ref,        # VMEM (HIDDEN, ACTION_DIM)
                         b2_ref,        # VMEM (1, ACTION_DIM)
                         out_ref,       # VMEM (M, ACTION_DIM)   == a_0
                         condh_buf,     # scratch VMEM (M, HIDDEN)
                         *, batch, seq):
    f32 = jnp.float32

    # ---- step-invariant conditioning (fused cond-concat + first-layer) -----
    #   condh[b*T + t] = pe[b, t] @ w1c_pe + goal[b] @ w1c_g + plan[b] @ w1c_p
    w1_pe = w1c_ref[0:PERCEPTUAL_EMB_DIM, :]
    w1_g = w1c_ref[PERCEPTUAL_EMB_DIM:PERCEPTUAL_EMB_DIM + LATENT_GOAL_DIM, :]
    w1_p = w1c_ref[PERCEPTUAL_EMB_DIM + LATENT_GOAL_DIM:COND_DIM, :]
    for b in range(batch):
        rows = slice(b * seq, (b + 1) * seq)
        gp_h = (jnp.dot(goal_ref[b:b + 1, :], w1_g, preferred_element_type=f32)
                + jnp.dot(plan_ref[b:b + 1, :], w1_p, preferred_element_type=f32))
        condh_buf[rows, :] = (
            jnp.dot(pe_ref[rows, :], w1_pe, preferred_element_type=f32) + gp_h)
    condh = condh_buf[...]

    # ---- step-invariant per-step rows, computed off the x->x chain ---------
    w1s_row = w1s_ref[...]
    b1_row = b1_ref[...]
    b2_row = b2_ref[...]
    bias_rows = [C_NOISE[i] * w1s_row + b1_row for i in range(NUM_SAMPLING_STEPS)]
    gamma_rows = [BETA[i] * b2_row for i in range(NUM_SAMPLING_STEPS)]
    w1x = w1x_ref[...]
    w2 = w2_ref[...]

    # ---- a_T = sigma_max * N(0,1); state x stays in vregs across steps -----
    x = SIGMA_MAX * noise_ref[...]

    # ---- fully-unrolled Euler sampler with baked Karras schedule -----------
    for i in range(NUM_SAMPLING_STEPS):
        # Inner score network: 2-layer MLP on [cond, c_in*x, c_noise].
        # (K=8 matmul kept on the MXU; c_in hoisted after the dot.)
        h = (condh + bias_rows[i]) + C_IN[i] * jnp.dot(
            x, w1x, preferred_element_type=f32)
        h = jnp.maximum(h, 0.0)                                  # ReLU (VPU)
        inner = jnp.dot(h, w2, preferred_element_type=f32)
        # Karras preconditioning + Euler step folded into one affine update.
        x = BETA[i] * inner + (ALPHA[i] * x + gamma_rows[i])

    out_ref[...] = x.astype(out_ref.dtype)


# --------------------------- schedule (reference) ----------------------------
def get_sigmas_karras(n, sigma_min, sigma_max, rho):
    ramp = jnp.linspace(0.0, 1.0, n)
    min_inv_rho = sigma_min ** (1.0 / rho)
    max_inv_rho = sigma_max ** (1.0 / rho)
    sigmas = (max_inv_rho + ramp * (min_inv_rho - max_inv_rho)) ** rho
    return jnp.concatenate([sigmas, jnp.zeros((1,), sigmas.dtype)])


# --------------------------------- wrapper -----------------------------------
@jax.jit
def diffusion_action_decoder_forward(latent_plan, perceptual_emb, latent_goal,
                                     noise, params):
    """Equivalent of DiffusionActionDecoder.act with sampler_type='euler',
    noise_scheduler='karras', batch > 1 branch (no deque context)."""
    b, t, pe_dim = perceptual_emb.shape
    m = b * t
    w1c, w1x, w1s, b1, w2, b2 = params

    pe = perceptual_emb.astype(jnp.float32).reshape(m, pe_dim)
    nz = noise.astype(jnp.float32).reshape(m, ACTION_DIM)
    goal = latent_goal.astype(jnp.float32)
    plan = latent_plan.astype(jnp.float32)

    kernel = functools.partial(_euler_sample_kernel, batch=b, seq=t)
    out = pl.pallas_call(
        kernel,
        out_shape=jax.ShapeDtypeStruct((m, ACTION_DIM), jnp.float32),
        in_specs=[pl.BlockSpec(memory_space=pltpu.MemorySpace.VMEM)] * 10,
        out_specs=pl.BlockSpec(memory_space=pltpu.MemorySpace.VMEM),
        scratch_shapes=[pltpu.VMEM((m, HIDDEN), jnp.float32)],
    )(pe, goal, plan, nz, w1c, w1x, w1s, b1, w2, b2)

    return out.reshape(b, t, ACTION_DIM)                     # a_0


# ----------------------------- pure-JAX reference ----------------------------
def _reference_forward(latent_plan, perceptual_emb, latent_goal, noise, params):
    b, t, _ = perceptual_emb.shape
    goal_b = jnp.broadcast_to(latent_goal[:, None, :], (b, t, latent_goal.shape[-1]))
    plan_b = jnp.broadcast_to(latent_plan[:, None, :], (b, t, latent_plan.shape[-1]))
    cond = jnp.concatenate([perceptual_emb, goal_b, plan_b], -1).reshape(b * t, COND_DIM)
    x = (noise * SIGMA_MAX).reshape(b * t, ACTION_DIM).astype(jnp.float32)
    sigmas = get_sigmas_karras(NUM_SAMPLING_STEPS, SIGMA_MIN, SIGMA_MAX, RHO)
    w1c, w1x, w1s, b1, w2, b2 = params
    condh = jnp.dot(cond, w1c, preferred_element_type=jnp.float32)
    for i in range(NUM_SAMPLING_STEPS):
        sig = sigmas[i]
        denom = sig * sig + SIGMA_DATA ** 2
        c_skip = SIGMA_DATA ** 2 / denom
        c_out = sig * SIGMA_DATA / jnp.sqrt(denom)
        c_in = 1.0 / jnp.sqrt(denom)
        c_noise = 0.25 * jnp.log(sig)
        h = condh + jnp.dot(c_in * x, w1x, preferred_element_type=jnp.float32)
        h = jnp.maximum(h + c_noise * w1s + b1, 0.0)
        inner = jnp.dot(h, w2, preferred_element_type=jnp.float32) + b2
        denoised = c_out * inner + c_skip * x
        d = (x - denoised) / sig
        x = x + d * (sigmas[i + 1] - sig)
    return x.reshape(b, t, ACTION_DIM)


# ----------------------------------- main ------------------------------------
if __name__ == "__main__":
    key = jax.random.PRNGKey(0)
    kp, kg, kpe, kn, k1, k2, k3, k4 = jax.random.split(key, 8)

    latent_plan = jax.random.normal(kp, (B, LATENT_PLAN_DIM), jnp.float32)
    latent_goal = jax.random.normal(kg, (B, LATENT_GOAL_DIM), jnp.float32)
    perceptual_emb = jax.random.normal(kpe, (B, T, PERCEPTUAL_EMB_DIM), jnp.float32)
    # torch.randn equivalent for a_T (scaled by sigma_max inside the kernel)
    noise = jax.random.normal(kn, (B, T, ACTION_DIM), jnp.float32)

    # deterministic synthetic denoiser parameters
    w1c = jax.random.normal(k1, (COND_DIM, HIDDEN), jnp.float32) / np.sqrt(COND_DIM)
    w1x = jax.random.normal(k2, (ACTION_DIM, HIDDEN), jnp.float32) / np.sqrt(ACTION_DIM)
    w1s = jax.random.normal(k3, (1, HIDDEN), jnp.float32) / np.sqrt(HIDDEN)
    b1 = jnp.zeros((1, HIDDEN), jnp.float32)
    w2 = jax.random.normal(k4, (HIDDEN, ACTION_DIM), jnp.float32) / np.sqrt(HIDDEN)
    b2 = jnp.zeros((1, ACTION_DIM), jnp.float32)
    params = (w1c, w1x, w1s, b1, w2, b2)

    a_0 = diffusion_action_decoder_forward(latent_plan, perceptual_emb,
                                           latent_goal, noise, params)
    a_0 = jax.block_until_ready(a_0)

    ref = _reference_forward(latent_plan, perceptual_emb, latent_goal, noise, params)
    ref = jax.block_until_ready(ref)

    err = float(jnp.max(jnp.abs(a_0 - ref)))
    scale = 1.0 + float(jnp.max(jnp.abs(ref)))
    assert a_0.shape == (B, T, ACTION_DIM)
    assert np.isfinite(np.asarray(a_0)).all()
    assert err < 2e-2 * scale, f"mismatch vs reference: {err}"

    # TODO(synk): the PyTorch module's deque-based obs/action context (batch==1
    # streaming path) and the other sampler variants are stateful/host-side and
    # are not reproduced in-kernel.
    print("KERNEL_OK")
</pallas_src>

<mosaic_0001>
module attributes {stable_mosaic.version = 11 : i64} {
  func.func @_euler_sample_kernel(%arg0: memref<16x32xf32, #tpu.memory_space<vmem>>, %arg1: memref<2x32xf32, #tpu.memory_space<vmem>>, %arg2: memref<2x32xf32, #tpu.memory_space<vmem>>, %arg3: memref<16x8xf32, #tpu.memory_space<vmem>>, %arg4: memref<96x64xf32, #tpu.memory_space<vmem>>, %arg5: memref<8x64xf32, #tpu.memory_space<vmem>>, %arg6: memref<1x64xf32, #tpu.memory_space<vmem>>, %arg7: memref<1x64xf32, #tpu.memory_space<vmem>>, %arg8: memref<64x8xf32, #tpu.memory_space<vmem>>, %arg9: memref<1x8xf32, #tpu.memory_space<vmem>>, %arg10: memref<16x8xf32, #tpu.memory_space<vmem>>, %arg11: memref<16x64xf32, #tpu.memory_space<vmem>>) attributes {dimension_semantics = [], scalar_prefetch = 0 : i64, scratch_operands = 1 : i64, tpu.core_type = #tpu.core_type<tc>} {
    %c0 = arith.constant 0 : index
    %c0_0 = arith.constant 0 : index
    %0 = vector.load %arg4[%c0, %c0_0] : memref<96x64xf32, #tpu.memory_space<vmem>>, vector<32x64xf32>
    %c32 = arith.constant 32 : index
    %c0_1 = arith.constant 0 : index
    %1 = vector.load %arg4[%c32, %c0_1] : memref<96x64xf32, #tpu.memory_space<vmem>>, vector<32x64xf32>
    %c64 = arith.constant 64 : index
    %c0_2 = arith.constant 0 : index
    %2 = vector.load %arg4[%c64, %c0_2] : memref<96x64xf32, #tpu.memory_space<vmem>>, vector<32x64xf32>
    %c0_3 = arith.constant 0 : index
    %c0_4 = arith.constant 0 : index
    %3 = vector.load %arg1[%c0_3, %c0_4] : memref<2x32xf32, #tpu.memory_space<vmem>>, vector<1x32xf32>
    %cst = arith.constant dense<0.000000e+00> : vector<1x64xf32>
    %4 = tpu.matmul %3, %1, %cst {dimension_numbers = #tpu.dot_dimension_numbers<[1], [0], [0], [1], [0, 0, 1, 1], [], []>} : vector<1x32xf32>, vector<32x64xf32>, vector<1x64xf32> -> vector<1x64xf32>
    %c0_5 = arith.constant 0 : index
    %c0_6 = arith.constant 0 : index
    %5 = vector.load %arg2[%c0_5, %c0_6] : memref<2x32xf32, #tpu.memory_space<vmem>>, vector<1x32xf32>
    %cst_7 = arith.constant dense<0.000000e+00> : vector<1x64xf32>
    %6 = tpu.matmul %5, %2, %cst_7 {dimension_numbers = #tpu.dot_dimension_numbers<[1], [0], [0], [1], [0, 0, 1, 1], [], []>} : vector<1x32xf32>, vector<32x64xf32>, vector<1x64xf32> -> vector<1x64xf32>
    %7 = arith.addf %4, %6 : vector<1x64xf32>
    %c0_8 = arith.constant 0 : index
    %c0_9 = arith.constant 0 : index
    %8 = vector.load %arg0[%c0_8, %c0_9] : memref<16x32xf32, #tpu.memory_space<vmem>>, vector<8x32xf32>
    %cst_10 = arith.constant dense<0.000000e+00> : vector<8x64xf32>
    %9 = tpu.matmul %8, %0, %cst_10 {dimension_numbers = #tpu.dot_dimension_numbers<[1], [0], [0], [1], [0, 0, 1, 1], [], []>} : vector<8x32xf32>, vector<32x64xf32>, vector<8x64xf32> -> vector<8x64xf32>
    %10 = vector.broadcast %7 : vector<1x64xf32> to vector<8x64xf32>
    %11 = arith.addf %9, %10 : vector<8x64xf32>
    %c0_11 = arith.constant 0 : index
    %c0_12 = arith.constant 0 : index
    %12 = vector.load %arg11[%c0_11, %c0_12] : memref<16x64xf32, #tpu.memory_space<vmem>>, vector<8x64xf32>
    tpu.vector_store %arg11[%c0_11, %c0_12], %11 {strides = array<i32>} : memref<16x64xf32, #tpu.memory_space<vmem>>, vector<8x64xf32>,
    %c1 = arith.constant 1 : index
    %c0_13 = arith.constant 0 : index
    %13 = vector.load %arg1[%c1, %c0_13] : memref<2x32xf32, #tpu.memory_space<vmem>>, vector<1x32xf32>
    %cst_14 = arith.constant dense<0.000000e+00> : vector<1x64xf32>
    %14 = tpu.matmul %13, %1, %cst_14 {dimension_numbers = #tpu.dot_dimension_numbers<[1], [0], [0], [1], [0, 0, 1, 1], [], []>} : vector<1x32xf32>, vector<32x64xf32>, vector<1x64xf32> -> vector<1x64xf32>
    %c1_15 = arith.constant 1 : index
    %c0_16 = arith.constant 0 : index
    %15 = vector.load %arg2[%c1_15, %c0_16] : memref<2x32xf32, #tpu.memory_space<vmem>>, vector<1x32xf32>
    %cst_17 = arith.constant dense<0.000000e+00> : vector<1x64xf32>
    %16 = tpu.matmul %15, %2, %cst_17 {dimension_numbers = #tpu.dot_dimension_numbers<[1], [0], [0], [1], [0, 0, 1, 1], [], []>} : vector<1x32xf32>, vector<32x64xf32>, vector<1x64xf32> -> vector<1x64xf32>
    %17 = arith.addf %14, %16 : vector<1x64xf32>
    %c8 = arith.constant 8 : index
    %c0_18 = arith.constant 0 : index
    %18 = vector.load %arg0[%c8, %c0_18] : memref<16x32xf32, #tpu.memory_space<vmem>>, vector<8x32xf32>
    %cst_19 = arith.constant dense<0.000000e+00> : vector<8x64xf32>
    %19 = tpu.matmul %18, %0, %cst_19 {dimension_numbers = #tpu.dot_dimension_numbers<[1], [0], [0], [1], [0, 0, 1, 1], [], []>} : vector<8x32xf32>, vector<32x64xf32>, vector<8x64xf32> -> vector<8x64xf32>
    %20 = vector.broadcast %17 : vector<1x64xf32> to vector<8x64xf32>
    %21 = arith.addf %19, %20 : vector<8x64xf32>
    %c8_20 = arith.constant 8 : index
    %c0_21 = arith.constant 0 : index
    %22 = vector.load %arg11[%c8_20, %c0_21] : memref<16x64xf32, #tpu.memory_space<vmem>>, vector<8x64xf32>
    tpu.vector_store %arg11[%c8_20, %c0_21], %21 {strides = array<i32>} : memref<16x64xf32, #tpu.memory_space<vmem>>, vector<8x64xf32>,
    %c0_22 = arith.constant 0 : index
    %c0_23 = arith.constant 0 : index
    %23 = vector.load %arg11[%c0_22, %c0_23] : memref<16x64xf32, #tpu.memory_space<vmem>>, vector<16x64xf32>
    %c0_24 = arith.constant 0 : index
    %c0_25 = arith.constant 0 : index
    %24 = vector.load %arg6[%c0_24, %c0_25] : memref<1x64xf32, #tpu.memory_space<vmem>>, vector<1x64xf32>
    %c0_26 = arith.constant 0 : index
    %c0_27 = arith.constant 0 : index
    %25 = vector.load %arg7[%c0_26, %c0_27] : memref<1x64xf32, #tpu.memory_space<vmem>>, vector<1x64xf32>
    %c0_28 = arith.constant 0 : index
    %c0_29 = arith.constant 0 : index
    %26 = vector.load %arg9[%c0_28, %c0_29] : memref<1x8xf32, #tpu.memory_space<vmem>>, vector<1x8xf32>
    %cst_30 = arith.constant 1.09550667 : f32
    %27 = vector.broadcast %cst_30 : f32 to vector<1x64xf32>
    %28 = arith.mulf %27, %24 : vector<1x64xf32>
    %29 = arith.addf %28, %25 : vector<1x64xf32>
    %cst_31 = arith.constant 0.552197337 : f32
    %30 = vector.broadcast %cst_31 : f32 to vector<1x64xf32>
    %31 = arith.mulf %30, %24 : vector<1x64xf32>
    %32 = arith.addf %31, %25 : vector<1x64xf32>
    %cst_32 = arith.constant -0.239930421 : f32
    %33 = vector.broadcast %cst_32 : f32 to vector<1x64xf32>
    %34 = arith.mulf %33, %24 : vector<1x64xf32>
    %35 = arith.addf %34, %25 : vector<1x64xf32>
    %cst_33 = arith.constant -1.72693884 : f32
    %36 = vector.broadcast %cst_33 : f32 to vector<1x64xf32>
    %37 = arith.mulf %36, %24 : vector<1x64xf32>
    %38 = arith.addf %37, %25 : vector<1x64xf32>
    %cst_34 = arith.constant 0.443087041 : f32
    %39 = vector.broadcast %cst_34 : f32 to vector<1x8xf32>
    %40 = arith.mulf %39, %26 : vector<1x8xf32>
    %cst_35 = arith.constant 0.478246301 : f32
    %41 = vector.broadcast %cst_35 : f32 to vector<1x8xf32>
    %42 = arith.mulf %41, %26 : vector<1x8xf32>
    %cst_36 = arith.constant 0.303254962 : f32
    %43 = vector.broadcast %cst_36 : f32 to vector<1x8xf32>
    %44 = arith.mulf %43, %26 : vector<1x8xf32>
    %cst_37 = arith.constant 9.99997952E-4 : f32
    %45 = vector.broadcast %cst_37 : f32 to vector<1x8xf32>
    %46 = arith.mulf %45, %26 : vector<1x8xf32>
    %c0_38 = arith.constant 0 : index
    %c0_39 = arith.constant 0 : index
    %47 = vector.load %arg5[%c0_38, %c0_39] : memref<8x64xf32, #tpu.memory_space<vmem>>, vector<8x64xf32>
    %c0_40 = arith.constant 0 : index
    %c0_41 = arith.constant 0 : index
    %48 = vector.load %arg8[%c0_40, %c0_41] : memref<64x8xf32, #tpu.memory_space<vmem>>, vector<64x8xf32>
    %c0_42 = arith.constant 0 : index
    %c0_43 = arith.constant 0 : index
    %49 = vector.load %arg3[%c0_42, %c0_43] : memref<16x8xf32, #tpu.memory_space<vmem>>, vector<16x8xf32>
    %cst_44 = arith.constant 8.000000e+01 : f32
    %50 = vector.broadcast %cst_44 : f32 to vector<16x8xf32>
    %51 = arith.mulf %50, %49 : vector<16x8xf32>
    %52 = vector.broadcast %29 : vector<1x64xf32> to vector<16x64xf32>
    %53 = arith.addf %23, %52 : vector<16x64xf32>
    %cst_45 = arith.constant dense<0.000000e+00> : vector<16x64xf32>
    %54 = tpu.matmul %51, %47, %cst_45 {dimension_numbers = #tpu.dot_dimension_numbers<[1], [0], [0], [1], [0, 0, 1, 1], [], []>} : vector<16x8xf32>, vector<8x64xf32>, vector<16x64xf32> -> vector<16x64xf32>
    %cst_46 = arith.constant 0.0124997562 : f32
    %55 = vector.broadcast %cst_46 : f32 to vector<16x64xf32>
    %56 = arith.mulf %55, %54 : vector<16x64xf32>
    %57 = arith.addf %53, %56 : vector<16x64xf32>
    %cst_47 = arith.constant 0.000000e+00 : f32
    %58 = vector.broadcast %cst_47 : f32 to vector<16x64xf32>
    %59 = arith.maximumf %57, %58 : vector<16x64xf32>
    %cst_48 = arith.constant dense<0.000000e+00> : vector<16x8xf32>
    %60 = tpu.matmul %59, %48, %cst_48 {dimension_numbers = #tpu.dot_dimension_numbers<[1], [0], [0], [1], [0, 0, 1, 1], [], []>} : vector<16x64xf32>, vector<64x8xf32>, vector<16x8xf32> -> vector<16x8xf32>
    %cst_49 = arith.constant 0.443087041 : f32
    %61 = vector.broadcast %cst_49 : f32 to vector<16x8xf32>
    %62 = arith.mulf %61, %60 : vector<16x8xf32>
    %cst_50 = arith.constant 0.11384321 : f32
    %63 = vector.broadcast %cst_50 : f32 to vector<16x8xf32>
    %64 = arith.mulf %63, %51 : vector<16x8xf32>
    %65 = vector.broadcast %40 : vector<1x8xf32> to vector<16x8xf32>
    %66 = arith.addf %64, %65 : vector<16x8xf32>
    %67 = arith.addf %62, %66 : vector<16x8xf32>
    %68 = vector.broadcast %32 : vector<1x64xf32> to vector<16x64xf32>
    %69 = arith.addf %23, %68 : vector<16x64xf32>
    %cst_51 = arith.constant dense<0.000000e+00> : vector<16x64xf32>
    %70 = tpu.matmul %67, %47, %cst_51 {dimension_numbers = #tpu.dot_dimension_numbers<[1], [0], [0], [1], [0, 0, 1, 1], [], []>} : vector<16x8xf32>, vector<8x64xf32>, vector<16x64xf32> -> vector<16x64xf32>
    %cst_52 = arith.constant 0.109668285 : f32
    %71 = vector.broadcast %cst_52 : f32 to vector<16x64xf32>
    %72 = arith.mulf %71, %70 : vector<16x64xf32>
    %73 = arith.addf %69, %72 : vector<16x64xf32>
    %cst_53 = arith.constant 0.000000e+00 : f32
    %74 = vector.broadcast %cst_53 : f32 to vector<16x64xf32>
    %75 = arith.maximumf %73, %74 : vector<16x64xf32>
    %cst_54 = arith.constant dense<0.000000e+00> : vector<16x8xf32>
    %76 = tpu.matmul %75, %48, %cst_54 {dimension_numbers = #tpu.dot_dimension_numbers<[1], [0], [0], [1], [0, 0, 1, 1], [], []>} : vector<16x64xf32>, vector<64x8xf32>, vector<16x8xf32> -> vector<16x8xf32>
    %cst_55 = arith.constant 0.478246301 : f32
    %77 = vector.broadcast %cst_55 : f32 to vector<16x8xf32>
    %78 = arith.mulf %77, %76 : vector<16x8xf32>
    %cst_56 = arith.constant 0.0449464843 : f32
    %79 = vector.broadcast %cst_56 : f32 to vector<16x8xf32>
    %80 = arith.mulf %79, %67 : vector<16x8xf32>
    %81 = vector.broadcast %42 : vector<1x8xf32> to vector<16x8xf32>
    %82 = arith.addf %80, %81 : vector<16x8xf32>
    %83 = arith.addf %78, %82 : vector<16x8xf32>
    %84 = vector.broadcast %35 : vector<1x64xf32> to vector<16x64xf32>
    %85 = arith.addf %23, %84 : vector<16x64xf32>
    %cst_57 = arith.constant dense<0.000000e+00> : vector<16x64xf32>
    %86 = tpu.matmul %83, %47, %cst_57 {dimension_numbers = #tpu.dot_dimension_numbers<[1], [0], [0], [1], [0, 0, 1, 1], [], []>} : vector<16x8xf32>, vector<8x64xf32>, vector<16x64xf32> -> vector<16x64xf32>
    %cst_58 = arith.constant 1.58772445 : f32
    %87 = vector.broadcast %cst_58 : f32 to vector<16x64xf32>
    %88 = arith.mulf %87, %86 : vector<16x64xf32>
    %89 = arith.addf %85, %88 : vector<16x64xf32>
    %cst_59 = arith.constant 0.000000e+00 : f32
    %90 = vector.broadcast %cst_59 : f32 to vector<16x64xf32>
    %91 = arith.maximumf %89, %90 : vector<16x64xf32>
    %cst_60 = arith.constant dense<0.000000e+00> : vector<16x8xf32>
    %92 = tpu.matmul %91, %48, %cst_60 {dimension_numbers = #tpu.dot_dimension_numbers<[1], [0], [0], [1], [0, 0, 1, 1], [], []>} : vector<16x64xf32>, vector<64x8xf32>, vector<16x8xf32> -> vector<16x8xf32>
    %cst_61 = arith.constant 0.303254962 : f32
    %93 = vector.broadcast %cst_61 : f32 to vector<16x8xf32>
    %94 = arith.mulf %93, %92 : vector<16x8xf32>
    %cst_62 = arith.constant 0.63118273 : f32
    %95 = vector.broadcast %cst_62 : f32 to vector<16x8xf32>
    %96 = arith.mulf %95, %83 : vector<16x8xf32>
    %97 = vector.broadcast %44 : vector<1x8xf32> to vector<16x8xf32>
    %98 = arith.addf %96, %97 : vector<16x8xf32>
    %99 = arith.addf %94, %98 : vector<16x8xf32>
    %100 = vector.broadcast %38 : vector<1x64xf32> to vector<16x64xf32>
    %101 = arith.addf %23, %100 : vector<16x64xf32>
    %cst_63 = arith.constant dense<0.000000e+00> : vector<16x64xf32>
    %102 = tpu.matmul %99, %47, %cst_63 {dimension_numbers = #tpu.dot_dimension_numbers<[1], [0], [0], [1], [0, 0, 1, 1], [], []>} : vector<16x8xf32>, vector<8x64xf32>, vector<16x64xf32> -> vector<16x64xf32>
    %cst_64 = arith.constant 1.99999595 : f32
    %103 = vector.broadcast %cst_64 : f32 to vector<16x64xf32>
    %104 = arith.mulf %103, %102 : vector<16x64xf32>
    %105 = arith.addf %101, %104 : vector<16x64xf32>
    %cst_65 = arith.constant 0.000000e+00 : f32
    %106 = vector.broadcast %cst_65 : f32 to vector<16x64xf32>
    %107 = arith.maximumf %105, %106 : vector<16x64xf32>
    %cst_66 = arith.constant dense<0.000000e+00> : vector<16x8xf32>
    %108 = tpu.matmul %107, %48, %cst_66 {dimension_numbers = #tpu.dot_dimension_numbers<[1], [0], [0], [1], [0, 0, 1, 1], [], []>} : vector<16x64xf32>, vector<64x8xf32>, vector<16x8xf32> -> vector<16x8xf32>
    %cst_67 = arith.constant 9.99997952E-4 : f32
    %109 = vector.broadcast %cst_67 : f32 to vector<16x8xf32>
    %110 = arith.mulf %109, %108 : vector<16x8xf32>
    %cst_68 = arith.constant 9.999960e-01 : f32
    %111 = vector.broadcast %cst_68 : f32 to vector<16x8xf32>
    %112 = arith.mulf %111, %99 : vector<16x8xf32>
    %113 = vector.broadcast %46 : vector<1x8xf32> to vector<16x8xf32>
    %114 = arith.addf %112, %113 : vector<16x8xf32>
    %115 = arith.addf %110, %114 : vector<16x8xf32>
    %c0_69 = arith.constant 0 : index
    %c0_70 = arith.constant 0 : index
    %116 = vector.load %arg10[%c0_69, %c0_70] : memref<16x8xf32, #tpu.memory_space<vmem>>, vector<16x8xf32>
    tpu.vector_store %arg10[%c0_69, %c0_70], %115 {strides = array<i32>} : memref<16x8xf32, #tpu.memory_space<vmem>>, vector<16x8xf32>,
    return
  }
}

</mosaic_0001>

<llo_original>
// kernel: diffusion_action_decoder_forward.1
$region0: #{diffusion_action_decoder_forward.1}
  #allocation0 [shape = 'u32[]', space=smem, size = 0x4, offset = 0x4, fixed_abs, tag = 'smem constant byte address 0x4 - core index']
  #allocation1 [shape = 'u32[144,128]{1,0:T(1,128)}', space=vmem, size = 0x12000, scoped, tag = 'internal scratch']
  #allocation2 [shape = 'f32[16,64]{1,0:T(8,128)}', space=vmem, size = 0x2000, scoped, tag = 'scratch operand']
  %s0 = inlined_call_operand.vmem [shape: f32[16,32], index: 0, kind: input, shape index: {}]
  %s1 = inlined_call_operand.vmem [shape: f32[2,32], index: 1, kind: input, shape index: {}]
  %s2 = inlined_call_operand.vmem [shape: f32[2,32], index: 2, kind: input, shape index: {}]
  %s3 = inlined_call_operand.vmem [shape: f32[16,8], index: 3, kind: input, shape index: {}]
  %s4 = inlined_call_operand.vmem [shape: f32[96,64], index: 4, kind: input, shape index: {}]
  %s5 = inlined_call_operand.vmem [shape: f32[8,64], index: 5, kind: input, shape index: {}]
  %s6 = inlined_call_operand.vmem [shape: f32[1,64], index: 6, kind: input, shape index: {}]
  %s7 = inlined_call_operand.vmem [shape: f32[1,64], index: 7, kind: input, shape index: {}]
  %s8 = inlined_call_operand.vmem [shape: f32[64,8], index: 8, kind: input, shape index: {}]
  %s9 = inlined_call_operand.vmem [shape: f32[1,8], index: 9, kind: input, shape index: {}]
  %s10 = inlined_call_operand.hbm [shape: f32[16,8], index: 10, kind: output, shape index: {}]
  %s11 = sld [smem:[#allocation0]]
  $region50: #{diffusion_action_decoder_forward.1} parent=0
    _
  %s13 = ssub.s32 1, %s11
  %s14 = scalar_select 0, %s13, %s11
  $region1: #{diffusion_action_decoder_forward.1} parent=0
    #allocation3 [shape = 'u8[8192]{0}', space=vmem, size = 0x2000, scoped, tag = 'output window, operand 0, single buffered']
    #allocation4 [shape = 's32[1]{0}', space=sflag, size = 0x4, scoped, tag = 'scoped memory for diffusion_action_decoder_forward.1']
    %15 = vsyncpa [#allocation4], 0
    // Predicated region
    $region2: #{diffusion_action_decoder_forward.1} parent=1 // pred_check
      _
    $region3: #{diffusion_action_decoder_forward.1} parent=1 // pred_check_branch
      %17 = sbr.rel (0) target = $region5
    $region4: #{diffusion_action_decoder_forward.1} parent=1 // pred_region
      _
    $region5: #{diffusion_action_decoder_forward.1} parent=1 // pred_fallthru
      _
    // Predicated region
    $region6: #{diffusion_action_decoder_forward.1} parent=1 // pred_check
      _
    $region7: #{diffusion_action_decoder_forward.1} parent=1 // pred_check_branch
      %19 = sbr.rel (0) target = $region9
    $region8: #{diffusion_action_decoder_forward.1} parent=1 // pred_region
      _
    $region9: #{diffusion_action_decoder_forward.1} parent=1 // pred_fallthru
      _
    // Predicated region
    $region10: #{diffusion_action_decoder_forward.1} parent=1 // pred_check
      _
    $region11: #{diffusion_action_decoder_forward.1} parent=1 // pred_check_branch
      %21 = sbr.rel (0) target = $region13
    $region12: #{diffusion_action_decoder_forward.1} parent=1 // pred_region
      _
    $region13: #{diffusion_action_decoder_forward.1} parent=1 // pred_fallthru
      _
    // Predicated region
    $region14: #{diffusion_action_decoder_forward.1} parent=1 // pred_check
      _
    $region15: #{diffusion_action_decoder_forward.1} parent=1 // pred_check_branch
      %23 = sbr.rel (0) target = $region17
    $region16: #{diffusion_action_decoder_forward.1} parent=1 // pred_region
      _
    $region17: #{diffusion_action_decoder_forward.1} parent=1 // pred_fallthru
      _
    // Predicated region
    $region18: #{diffusion_action_decoder_forward.1} parent=1 // pred_check
      _
    $region19: #{diffusion_action_decoder_forward.1} parent=1 // pred_check_branch
      %25 = sbr.rel (0) target = $region21
    $region20: #{diffusion_action_decoder_forward.1} parent=1 // pred_region
      _
    $region21: #{diffusion_action_decoder_forward.1} parent=1 // pred_fallthru
      _
    // Predicated region
    $region22: #{diffusion_action_decoder_forward.1} parent=1 // pred_check
      _
    $region23: #{diffusion_action_decoder_forward.1} parent=1 // pred_check_branch
      %27 = sbr.rel (0) target = $region25
    $region24: #{diffusion_action_decoder_forward.1} parent=1 // pred_region
      _
    $region25: #{diffusion_action_decoder_forward.1} parent=1 // pred_fallthru
      _
    // Predicated region
    $region26: #{diffusion_action_decoder_forward.1} parent=1 // pred_check
      _
    $region27: #{diffusion_action_decoder_forward.1} parent=1 // pred_check_branch
      %29 = sbr.rel (0) target = $region29
    $region28: #{diffusion_action_decoder_forward.1} parent=1 // pred_region
      _
    $region29: #{diffusion_action_decoder_forward.1} parent=1 // pred_fallthru
      _
    // Predicated region
    $region30: #{diffusion_action_decoder_forward.1} parent=1 // pred_check
      _
    $region31: #{diffusion_action_decoder_forward.1} parent=1 // pred_check_branch
      %31 = sbr.rel (0) target = $region33
    $region32: #{diffusion_action_decoder_forward.1} parent=1 // pred_region
      _
    $region33: #{diffusion_action_decoder_forward.1} parent=1 // pred_fallthru
      _
    // Predicated region
    $region34: #{diffusion_action_decoder_forward.1} parent=1 // pred_check
      _
    $region35: #{diffusion_action_decoder_forward.1} parent=1 // pred_check_branch
      %33 = sbr.rel (0) target = $region37
    $region36: #{diffusion_action_decoder_forward.1} parent=1 // pred_region
      _
    $region37: #{diffusion_action_decoder_forward.1} parent=1 // pred_fallthru
      _
    // Predicated region
    $region38: #{diffusion_action_decoder_forward.1} parent=1 // pred_check
      _
    $region39: #{diffusion_action_decoder_forward.1} parent=1 // pred_check_branch
      %35 = sbr.rel (0) target = $region41
    $region40: #{diffusion_action_decoder_forward.1} parent=1 // pred_region
      _
    $region41: #{diffusion_action_decoder_forward.1} parent=1 // pred_fallthru
      _
    %v36 = vld [vmem:[%s4] sm:$0xff]
    %v37 = vld [vmem:[%s4 + $0x8] sm:$0xff]
    %v38 = vld [vmem:[%s4 + $0x10] sm:$0xff]
    %v39 = vld [vmem:[%s4 + $0x18] sm:$0xff]
    %v40 = vld [vmem:[%s4 + $0x20] sm:$0xff]
    %v41 = vld [vmem:[%s4 + $0x28] sm:$0xff]
    %v42 = vld [vmem:[%s4 + $0x30] sm:$0xff]
    %v43 = vld [vmem:[%s4 + $0x38] sm:$0xff]
    %v44 = vld [vmem:[%s4 + $0x40] sm:$0xff]
    %v45 = vld [vmem:[%s4 + $0x48] sm:$0xff]
    %v46 = vld [vmem:[%s4 + $0x50] sm:$0xff]
    %v47 = vld [vmem:[%s4 + $0x58] sm:$0xff]
    %v48 = vld [vmem:[%s1] sm:$0x1]
    %v49 = vld [vmem:[%s2] sm:$0x1]
    %vm50 = vcmask 261120
    %v52 = vsel %vm50, %v49, 0
    %54 = vmatprep.subr.mxu0 0.0
    %55 = vmatpush1.msra.mxu0 0.0
    %56 = vmatprep.subr.mxu0 0.0
    %57 = vmatpush1.msra.mxu0 0.0
    %58 = vmatprep.subr.mxu0 0.0
    %59 = vmatpush1.msra.mxu0 0.0
    %60 = vmatprep.subr.mxu0 0.0
    %61 = vmatpush1.msra.mxu0 0.0
    %62 = vmatprep.subr.mxu0 0.0
    %63 = vmatpush1.msra.mxu0 0.0
    %64 = vmatprep.subr.mxu0 0.0
    %65 = vmatpush1.msra.mxu0 0.0
    %66 = vmatprep.subr.mxu0 0.0
    %67 = vmatpush1.msra.mxu0 0.0
    %68 = vmatprep.subr.mxu0 0.0
    %69 = vmatpush1.msra.mxu0 0.0
    %70 = vmatprep.subr.mxu0 0.0
    %71 = vmatpush1.msra.mxu0 0.0
    %72 = vmatprep.subr.mxu0 0.0
    %73 = vmatpush1.msra.mxu0 0.0
    %74 = vmatprep.subr.mxu0 0.0
    %75 = vmatpush1.msra.mxu0 0.0
    %76 = vmatprep.subr.mxu0 0.0
    %77 = vmatpush1.msra.mxu0 0.0
    %78 = vmatprep.subr.mxu0 0.0
    %79 = vmatpush1.msra.mxu0 %v47
    %80 = vmatprep.subr.mxu0 0.0
    %81 = vmatpush1.msra.mxu0 %v46
    %82 = vmatprep.subr.mxu0 0.0
    %83 = vmatpush1.msra.mxu0 %v45
    %84 = vmatprep.subr.mxu0 0.0
    %85 = vmatpush1.msra.mxu0 %v44
    %86 = vmatprep.subr.mxu0 0.0
    %87 = vmatpush2.msra.mxu0 0.0
    %88 = vmatprep.subr.mxu0 0.0
    %89 = vmatpush2.msra.mxu0 0.0
    %90 = vmatprep.subr.mxu0 0.0
    %91 = vmatpush2.msra.mxu0 0.0
    %92 = vmatprep.subr.mxu0 0.0
    %93 = vmatpush2.msra.mxu0 0.0
    %94 = vmatprep.subr.mxu0 0.0
    %95 = vmatpush2.msra.mxu0 0.0
    %96 = vmatprep.subr.mxu0 0.0
    %97 = vmatpush2.msra.mxu0 0.0
    %98 = vmatprep.subr.mxu0 0.0
    %99 = vmatpush2.msra.mxu0 0.0
    %100 = vmatprep.subr.mxu0 0.0
    %101 = vmatpush2.msra.mxu0 0.0
    %102 = vmatprep.subr.mxu0 0.0
    %103 = vmatpush2.msra.mxu0 0.0
    %104 = vmatprep.subr.mxu0 0.0
    %105 = vmatpush2.msra.mxu0 0.0
    %106 = vmatprep.subr.mxu0 0.0
    %107 = vmatpush2.msra.mxu0 0.0
    %108 = vmatprep.subr.mxu0 0.0
    %109 = vmatpush2.msra.mxu0 0.0
    %110 = vmatprep.subr.mxu0 0.0
    %111 = vmatpush2.msra.mxu0 0.0
    %112 = vmatprep.subr.mxu0 0.0
    %113 = vmatpush2.msra.mxu0 0.0
    %114 = vmatprep.subr.mxu0 0.0
    %115 = vmatpush2.msra.mxu0 0.0
    %116 = vmatprep.subr.mxu0 0.0
    %117 = vmatpush2.msra.mxu0 0.0
    %118 = vmatprep.mubr.f32.mxu0 0.0
    %119 = vmatmul.mubr.f32.gmra.mxu0 %v52
    %v120 = vpop.f32.mrf.mxu0
    %v121 = vadd.f32 0.0, %v120
    %v122 = vpop.f32.mrf.mxu0
    %123 = vdwg.mxu0
    %v125 = vsel %vm50, %v48, 0
    %127 = vmatprep.subr.mxu0 0.0
    %128 = vmatpush1.msra.mxu0 0.0
    %129 = vmatprep.subr.mxu0 0.0
    %130 = vmatpush1.msra.mxu0 0.0
    %131 = vmatprep.subr.mxu0 0.0
    %132 = vmatpush1.msra.mxu0 0.0
    %133 = vmatprep.subr.mxu0 0.0
    %134 = vmatpush1.msra.mxu0 0.0
    %135 = vmatprep.subr.mxu0 0.0
    %136 = vmatpush1.msra.mxu0 0.0
    %137 = vmatprep.subr.mxu0 0.0
    %138 = vmatpush1.msra.mxu0 0.0
    %139 = vmatprep.subr.mxu0 0.0
    %140 = vmatpush1.msra.mxu0 0.0
    %141 = vmatprep.subr.mxu0 0.0
    %142 = vmatpush1.msra.mxu0 0.0
    %143 = vmatprep.subr.mxu0 0.0
    %144 = vmatpush1.msra.mxu0 0.0
    %145 = vmatprep.subr.mxu0 0.0
    %146 = vmatpush1.msra.mxu0 0.0
    %147 = vmatprep.subr.mxu0 0.0
    %148 = vmatpush1.msra.mxu0 0.0
    %149 = vmatprep.subr.mxu0 0.0
    %150 = vmatpush1.msra.mxu0 0.0
    %151 = vmatprep.subr.mxu0 0.0
    %152 = vmatpush1.msra.mxu0 %v43
    %153 = vmatprep.subr.mxu0 0.0
    %154 = vmatpush1.msra.mxu0 %v42
    %155 = vmatprep.subr.mxu0 0.0
    %156 = vmatpush1.msra.mxu0 %v41
    %157 = vmatprep.subr.mxu0 0.0
    %158 = vmatpush1.msra.mxu0 %v40
    %159 = vmatprep.subr.mxu0 0.0
    %160 = vmatpush2.msra.mxu0 0.0
    %161 = vmatprep.subr.mxu0 0.0
    %162 = vmatpush2.msra.mxu0 0.0
    %163 = vmatprep.subr.mxu0 0.0
    %164 = vmatpush2.msra.mxu0 0.0
    %165 = vmatprep.subr.mxu0 0.0
    %166 = vmatpush2.msra.mxu0 0.0
    %167 = vmatprep.subr.mxu0 0.0
    %168 = vmatpush2.msra.mxu0 0.0
    %169 = vmatprep.subr.mxu0 0.0
    %170 = vmatpush2.msra.mxu0 0.0
    %171 = vmatprep.subr.mxu0 0.0
    %172 = vmatpush2.msra.mxu0 0.0
    %173 = vmatprep.subr.mxu0 0.0
    %174 = vmatpush2.msra.mxu0 0.0
    %175 = vmatprep.subr.mxu0 0.0
    %176 = vmatpush2.msra.mxu0 0.0
    %177 = vmatprep.subr.mxu0 0.0
    %178 = vmatpush2.msra.mxu0 0.0
    %179 = vmatprep.subr.mxu0 0.0
    %180 = vmatpush2.msra.mxu0 0.0
    %181 = vmatprep.subr.mxu0 0.0
    %182 = vmatpush2.msra.mxu0 0.0
    %183 = vmatprep.subr.mxu0 0.0
    %184 = vmatpush2.msra.mxu0 0.0
    %185 = vmatprep.subr.mxu0 0.0
    %186 = vmatpush2.msra.mxu0 0.0
    %187 = vmatprep.subr.mxu0 0.0
    %188 = vmatpush2.msra.mxu0 0.0
    %189 = vmatprep.subr.mxu0 0.0
    %190 = vmatpush2.msra.mxu0 0.0
    %191 = vmatprep.mubr.f32.mxu0 0.0
    %192 = vmatmul.mubr.f32.gmra.mxu0 %v125
    %v193 = vpop.f32.mrf.mxu0
    %v194 = vadd.f32 %v121, %v193
    %v195 = vpop.f32.mrf.mxu0
    %196 = vdwg.mxu0
    %v197 = vld [vmem:[%s0] sm:$0xff]
    %v198 = vlaneseq
    %v199 = vshrl.u32 %v198, 7
    %v200 = vsub.s32 0, %v199
    %v201 = vrot.slane %v194, %v200
    %v203 = vsel %vm50, %v197, 0
    %205 = vmatprep.subr.mxu0 0.0
    %206 = vmatpush1.msra.mxu0 0.0
    %207 = vmatprep.subr.mxu0 0.0
    %208 = vmatpush1.msra.mxu0 0.0
    %209 = vmatprep.subr.mxu0 0.0
    %210 = vmatpush1.msra.mxu0 0.0
    %211 = vmatprep.subr.mxu0 0.0
    %212 = vmatpush1.msra.mxu0 0.0
    %213 = vmatprep.subr.mxu0 0.0
    %214 = vmatpush1.msra.mxu0 0.0
    %215 = vmatprep.subr.mxu0 0.0
    %216 = vmatpush1.msra.mxu0 0.0
    %217 = vmatprep.subr.mxu0 0.0
    %218 = vmatpush1.msra.mxu0 0.0
    %219 = vmatprep.subr.mxu0 0.0
    %220 = vmatpush1.msra.mxu0 0.0
    %221 = vmatprep.subr.mxu0 0.0
    %222 = vmatpush1.msra.mxu0 0.0
    %223 = vmatprep.subr.mxu0 0.0
    %224 = vmatpush1.msra.mxu0 0.0
    %225 = vmatprep.subr.mxu0 0.0
    %226 = vmatpush1.msra.mxu0 0.0
    %227 = vmatprep.subr.mxu0 0.0
    %228 = vmatpush1.msra.mxu0 0.0
    %229 = vmatprep.subr.mxu0 0.0
    %230 = vmatpush1.msra.mxu0 %v39
    %231 = vmatprep.subr.mxu0 0.0
    %232 = vmatpush1.msra.mxu0 %v38
    %233 = vmatprep.subr.mxu0 0.0
    %234 = vmatpush1.msra.mxu0 %v37
    %235 = vmatprep.subr.mxu0 0.0
    %236 = vmatpush1.msra.mxu0 %v36
    %237 = vmatprep.subr.mxu0 0.0
    %238 = vmatpush2.msra.mxu0 0.0
    %239 = vmatprep.subr.mxu0 0.0
    %240 = vmatpush2.msra.mxu0 0.0
    %241 = vmatprep.subr.mxu0 0.0
    %242 = vmatpush2.msra.mxu0 0.0
    %243 = vmatprep.subr.mxu0 0.0
    %244 = vmatpush2.msra.mxu0 0.0
    %245 = vmatprep.subr.mxu0 0.0
    %246 = vmatpush2.msra.mxu0 0.0
    %247 = vmatprep.subr.mxu0 0.0
    %248 = vmatpush2.msra.mxu0 0.0
    %249 = vmatprep.subr.mxu0 0.0
    %250 = vmatpush2.msra.mxu0 0.0
    %251 = vmatprep.subr.mxu0 0.0
    %252 = vmatpush2.msra.mxu0 0.0
    %253 = vmatprep.subr.mxu0 0.0
    %254 = vmatpush2.msra.mxu0 0.0
    %255 = vmatprep.subr.mxu0 0.0
    %256 = vmatpush2.msra.mxu0 0.0
    %257 = vmatprep.subr.mxu0 0.0
    %258 = vmatpush2.msra.mxu0 0.0
    %259 = vmatprep.subr.mxu0 0.0
    %260 = vmatpush2.msra.mxu0 0.0
    %261 = vmatprep.subr.mxu0 0.0
    %262 = vmatpush2.msra.mxu0 0.0
    %263 = vmatprep.subr.mxu0 0.0
    %264 = vmatpush2.msra.mxu0 0.0
    %265 = vmatprep.subr.mxu0 0.0
    %266 = vmatpush2.msra.mxu0 0.0
    %267 = vmatprep.subr.mxu0 0.0
    %268 = vmatpush2.msra.mxu0 0.0
    %269 = vmatprep.mubr.f32.mxu0 0.0
    %270 = vmatmul.mubr.f32.gmra.mxu0 %v203
    %v271 = vpop.f32.mrf.mxu0
    %v272 = vadd.f32 %v201, %v271
    %v273 = vpop.f32.mrf.mxu0
    %274 = vdwg.mxu0
    %vm275 = vcmask 523264
    %276 = vst.msk [vmem:[#allocation2] sm:$0xff] %vm275, %v272
    %v277 = vld [vmem:[%s1 + $0x1] sm:$0x1]
    %v278 = vld [vmem:[%s2 + $0x1] sm:$0x1]
    %v280 = vsel %vm50, %v278, 0
    %282 = vmatprep.subr.mxu0 0.0
    %283 = vmatpush1.msra.mxu0 0.0
    %284 = vmatprep.subr.mxu0 0.0
    %285 = vmatpush1.msra.mxu0 0.0
    %286 = vmatprep.subr.mxu0 0.0
    %287 = vmatpush1.msra.mxu0 0.0
    %288 = vmatprep.subr.mxu0 0.0
    %289 = vmatpush1.msra.mxu0 0.0
    %290 = vmatprep.subr.mxu0 0.0
    %291 = vmatpush1.msra.mxu0 0.0
    %292 = vmatprep.subr.mxu0 0.0
    %293 = vmatpush1.msra.mxu0 0.0
    %294 = vmatprep.subr.mxu0 0.0
    %295 = vmatpush1.msra.mxu0 0.0
    %296 = vmatprep.subr.mxu0 0.0
    %297 = vmatpush1.msra.mxu0 0.0
    %298 = vmatprep.subr.mxu0 0.0
    %299 = vmatpush1.msra.mxu0 0.0
    %300 = vmatprep.subr.mxu0 0.0
    %301 = vmatpush1.msra.mxu0 0.0
    %302 = vmatprep.subr.mxu0 0.0
    %303 = vmatpush1.msra.mxu0 0.0
    %304 = vmatprep.subr.mxu0 0.0
    %305 = vmatpush1.msra.mxu0 0.0
    %306 = vmatprep.subr.mxu0 0.0
    %307 = vmatpush1.msra.mxu0 %v47
    %308 = vmatprep.subr.mxu0 0.0
    %309 = vmatpush1.msra.mxu0 %v46
    %310 = vmatprep.subr.mxu0 0.0
    %311 = vmatpush1.msra.mxu0 %v45
    %312 = vmatprep.subr.mxu0 0.0
    %313 = vmatpush1.msra.mxu0 %v44
    %314 = vmatprep.subr.mxu0 0.0
    %315 = vmatpush2.msra.mxu0 0.0
    %316 = vmatprep.subr.mxu0 0.0
    %317 = vmatpush2.msra.mxu0 0.0
    %318 = vmatprep.subr.mxu0 0.0
    %319 = vmatpush2.msra.mxu0 0.0
    %320 = vmatprep.subr.mxu0 0.0
    %321 = vmatpush2.msra.mxu0 0.0
    %322 = vmatprep.subr.mxu0 0.0
    %323 = vmatpush2.msra.mxu0 0.0
    %324 = vmatprep.subr.mxu0 0.0
    %325 = vmatpush2.msra.mxu0 0.0
    %326 = vmatprep.subr.mxu0 0.0
    %327 = vmatpush2.msra.mxu0 0.0
    %328 = vmatprep.subr.mxu0 0.0
    %329 = vmatpush2.msra.mxu0 0.0
    %330 = vmatprep.subr.mxu0 0.0
    %331 = vmatpush2.msra.mxu0 0.0
    %332 = vmatprep.subr.mxu0 0.0
    %333 = vmatpush2.msra.mxu0 0.0
    %334 = vmatprep.subr.mxu0 0.0
    %335 = vmatpush2.msra.mxu0 0.0
    %336 = vmatprep.subr.mxu0 0.0
    %337 = vmatpush2.msra.mxu0 0.0
    %338 = vmatprep.subr.mxu0 0.0
    %339 = vmatpush2.msra.mxu0 0.0
    %340 = vmatprep.subr.mxu0 0.0
    %341 = vmatpush2.msra.mxu0 0.0
    %342 = vmatprep.subr.mxu0 0.0
    %343 = vmatpush2.msra.mxu0 0.0
    %344 = vmatprep.subr.mxu0 0.0
    %345 = vmatpush2.msra.mxu0 0.0
    %346 = vmatprep.mubr.f32.mxu0 0.0
    %347 = vmatmul.mubr.f32.gmra.mxu0 %v280
    %v348 = vpop.f32.mrf.mxu0
    %v349 = vadd.f32 0.0, %v348
    %v350 = vpop.f32.mrf.mxu0
    %351 = vdwg.mxu0
    %v353 = vsel %vm50, %v277, 0
    %355 = vmatprep.subr.mxu0 0.0
    %356 = vmatpush1.msra.mxu0 0.0
    %357 = vmatprep.subr.mxu0 0.0
    %358 = vmatpush1.msra.mxu0 0.0
    %359 = vmatprep.subr.mxu0 0.0
    %360 = vmatpush1.msra.mxu0 0.0
    %361 = vmatprep.subr.mxu0 0.0
    %362 = vmatpush1.msra.mxu0 0.0
    %363 = vmatprep.subr.mxu0 0.0
    %364 = vmatpush1.msra.mxu0 0.0
    %365 = vmatprep.subr.mxu0 0.0
    %366 = vmatpush1.msra.mxu0 0.0
    %367 = vmatprep.subr.mxu0 0.0
    %368 = vmatpush1.msra.mxu0 0.0
    %369 = vmatprep.subr.mxu0 0.0
    %370 = vmatpush1.msra.mxu0 0.0
    %371 = vmatprep.subr.mxu0 0.0
    %372 = vmatpush1.msra.mxu0 0.0
    %373 = vmatprep.subr.mxu0 0.0
    %374 = vmatpush1.msra.mxu0 0.0
    %375 = vmatprep.subr.mxu0 0.0
    %376 = vmatpush1.msra.mxu0 0.0
    %377 = vmatprep.subr.mxu0 0.0
    %378 = vmatpush1.msra.mxu0 0.0
    %379 = vmatprep.subr.mxu0 0.0
    %380 = vmatpush1.msra.mxu0 %v43
    %381 = vmatprep.subr.mxu0 0.0
    %382 = vmatpush1.msra.mxu0 %v42
    %383 = vmatprep.subr.mxu0 0.0
    %384 = vmatpush1.msra.mxu0 %v41
    %385 = vmatprep.subr.mxu0 0.0
    %386 = vmatpush1.msra.mxu0 %v40
    %387 = vmatprep.subr.mxu0 0.0
    %388 = vmatpush2.msra.mxu0 0.0
    %389 = vmatprep.subr.mxu0 0.0
    %390 = vmatpush2.msra.mxu0 0.0
    %391 = vmatprep.subr.mxu0 0.0
    %392 = vmatpush2.msra.mxu0 0.0
    %393 = vmatprep.subr.mxu0 0.0
    %394 = vmatpush2.msra.mxu0 0.0
    %395 = vmatprep.subr.mxu0 0.0
    %396 = vmatpush2.msra.mxu0 0.0
    %397 = vmatprep.subr.mxu0 0.0
    %398 = vmatpush2.msra.mxu0 0.0
    %399 = vmatprep.subr.mxu0 0.0
    %400 = vmatpush2.msra.mxu0 0.0
    %401 = vmatprep.subr.mxu0 0.0
    %402 = vmatpush2.msra.mxu0 0.0
    %403 = vmatprep.subr.mxu0 0.0
    %404 = vmatpush2.msra.mxu0 0.0
    %405 = vmatprep.subr.mxu0 0.0
    %406 = vmatpush2.msra.mxu0 0.0
    %407 = vmatprep.subr.mxu0 0.0
    %408 = vmatpush2.msra.mxu0 0.0
    %409 = vmatprep.subr.mxu0 0.0
    %410 = vmatpush2.msra.mxu0 0.0
    %411 = vmatprep.subr.mxu0 0.0
    %412 = vmatpush2.msra.mxu0 0.0
    %413 = vmatprep.subr.mxu0 0.0
    %414 = vmatpush2.msra.mxu0 0.0
    %415 = vmatprep.subr.mxu0 0.0
    %416 = vmatpush2.msra.mxu0 0.0
    %417 = vmatprep.subr.mxu0 0.0
    %418 = vmatpush2.msra.mxu0 0.0
    %419 = vmatprep.mubr.f32.mxu0 0.0
    %420 = vmatmul.mubr.f32.gmra.mxu0 %v353
    %v421 = vpop.f32.mrf.mxu0
    %v422 = vadd.f32 %v349, %v421
    %v423 = vpop.f32.mrf.mxu0
    %424 = vdwg.mxu0
    %v425 = vld [vmem:[%s0 + $0x8] sm:$0xff]
    %v426 = vlaneseq
    %v427 = vshrl.u32 %v426, 7
    %v428 = vsub.s32 0, %v427
    %v429 = vrot.slane %v422, %v428
    %v431 = vsel %vm50, %v425, 0
    %433 = vmatprep.subr.mxu0 0.0
    %434 = vmatpush1.msra.mxu0 0.0
    %435 = vmatprep.subr.mxu0 0.0
    %436 = vmatpush1.msra.mxu0 0.0
    %437 = vmatprep.subr.mxu0 0.0
    %438 = vmatpush1.msra.mxu0 0.0
    %439 = vmatprep.subr.mxu0 0.0
    %440 = vmatpush1.msra.mxu0 0.0
    %441 = vmatprep.subr.mxu0 0.0
    %442 = vmatpush1.msra.mxu0 0.0
    %443 = vmatprep.subr.mxu0 0.0
    %444 = vmatpush1.msra.mxu0 0.0
    %445 = vmatprep.subr.mxu0 0.0
    %446 = vmatpush1.msra.mxu0 0.0
    %447 = vmatprep.subr.mxu0 0.0
    %448 = vmatpush1.msra.mxu0 0.0
    %449 = vmatprep.subr.mxu0 0.0
    %450 = vmatpush1.msra.mxu0 0.0
    %451 = vmatprep.subr.mxu0 0.0
    %452 = vmatpush1.msra.mxu0 0.0
    %453 = vmatprep.subr.mxu0 0.0
    %454 = vmatpush1.msra.mxu0 0.0
    %455 = vmatprep.subr.mxu0 0.0
    %456 = vmatpush1.msra.mxu0 0.0
    %457 = vmatprep.subr.mxu0 0.0
    %458 = vmatpush1.msra.mxu0 %v39
    %459 = vmatprep.subr.mxu0 0.0
    %460 = vmatpush1.msra.mxu0 %v38
    %461 = vmatprep.subr.mxu0 0.0
    %462 = vmatpush1.msra.mxu0 %v37
    %463 = vmatprep.subr.mxu0 0.0
    %464 = vmatpush1.msra.mxu0 %v36
    %465 = vmatprep.subr.mxu0 0.0
    %466 = vmatpush2.msra.mxu0 0.0
    %467 = vmatprep.subr.mxu0 0.0
    %468 = vmatpush2.msra.mxu0 0.0
    %469 = vmatprep.subr.mxu0 0.0
    %470 = vmatpush2.msra.mxu0 0.0
    %471 = vmatprep.subr.mxu0 0.0
    %472 = vmatpush2.msra.mxu0 0.0
    %473 = vmatprep.subr.mxu0 0.0
    %474 = vmatpush2.msra.mxu0 0.0
    %475 = vmatprep.subr.mxu0 0.0
    %476 = vmatpush2.msra.mxu0 0.0
    %477 = vmatprep.subr.mxu0 0.0
    %478 = vmatpush2.msra.mxu0 0.0
    %479 = vmatprep.subr.mxu0 0.0
    %480 = vmatpush2.msra.mxu0 0.0
    %481 = vmatprep.subr.mxu0 0.0
    %482 = vmatpush2.msra.mxu0 0.0
    %483 = vmatprep.subr.mxu0 0.0
    %484 = vmatpush2.msra.mxu0 0.0
    %485 = vmatprep.subr.mxu0 0.0
    %486 = vmatpush2.msra.mxu0 0.0
    %487 = vmatprep.subr.mxu0 0.0
    %488 = vmatpush2.msra.mxu0 0.0
    %489 = vmatprep.subr.mxu0 0.0
    %490 = vmatpush2.msra.mxu0 0.0
    %491 = vmatprep.subr.mxu0 0.0
    %492 = vmatpush2.msra.mxu0 0.0
    %493 = vmatprep.subr.mxu0 0.0
    %494 = vmatpush2.msra.mxu0 0.0
    %495 = vmatprep.subr.mxu0 0.0
    %496 = vmatpush2.msra.mxu0 0.0
    %497 = vmatprep.mubr.f32.mxu0 0.0
    %498 = vmatmul.mubr.f32.gmra.mxu0 %v431
    %v499 = vpop.f32.mrf.mxu0
    %v500 = vadd.f32 %v429, %v499
    %v501 = vpop.f32.mrf.mxu0
    %502 = vdwg.mxu0
    %503 = vst.msk [vmem:[#allocation2 + $0x8] sm:$0xff] %vm275, %v500
    %v504 = vld [vmem:[#allocation2] sm:$0xff]
    %v505 = vld [vmem:[#allocation2 + $0x8] sm:$0xff]
    %v506 = vld [vmem:[%s6] sm:$0x1]
    %v507 = vld [vmem:[%s7] sm:$0x1]
    %v508 = vld [vmem:[%s9] sm:$0x1]
    %v509 = vmul.f32 %v506, 1.0955067
    %v510 = vadd.f32 %v509, %v507
    %v511 = vmul.f32 %v506, 0.55219734
    %v512 = vadd.f32 %v511, %v507
    %v513 = vmul.f32 %v506, -0.23993042
    %v514 = vadd.f32 %v513, %v507
    %v515 = vmul.f32 %v506, -1.7269388
    %v516 = vadd.f32 %v515, %v507
    %v517 = vmul.f32 %v508, 0.44308704
    %v518 = vmul.f32 %v508, 0.4782463
    %v519 = vmul.f32 %v508, 0.30325496
    %v520 = vmul.f32 %v508, 0.000999998
    %v521 = vld [vmem:[%s5] sm:$0xff]
    %v522 = vld [vmem:[%s8] sm:$0xff]
    %v523 = vld [vmem:[%s8 + $0x8] sm:$0xff]
    %v524 = vld [vmem:[%s8 + $0x10] sm:$0xff]
    %v525 = vld [vmem:[%s8 + $0x18] sm:$0xff]
    %v526 = vld [vmem:[%s8 + $0x20] sm:$0xff]
    %v527 = vld [vmem:[%s8 + $0x28] sm:$0xff]
    %v528 = vld [vmem:[%s8 + $0x30] sm:$0xff]
    %v529 = vld [vmem:[%s8 + $0x38] sm:$0xff]
    %v530 = vld [vmem:[%s3] sm:$0xff]
    %v531 = vld [vmem:[%s3 + $0x8] sm:$0xff]
    %v532 = vmul.f32 %v530, 80.0
    %v533 = vmul.f32 %v531, 80.0
    %v535 = vlaneseq
    %v536 = vshrl.u32 %v535, 7
    %v537 = vsub.s32 0, %v536
    %v538 = vrot.slane %v510, %v537
    %v540 = vadd.f32 %v504, %v538
    %v541 = vadd.f32 %v505, %v538
    %vm542 = vcmask 64512
    %v544 = vsel %vm542, %v532, 0
    %v547 = vsel %vm542, %v533, 0
    %549 = vmatprep.subr.mxu0 0.0
    %550 = vmatpush1.msra.mxu0 0.0
    %551 = vmatprep.subr.mxu0 0.0
    %552 = vmatpush1.msra.mxu0 0.0
    %553 = vmatprep.subr.mxu0 0.0
    %554 = vmatpush1.msra.mxu0 0.0
    %555 = vmatprep.subr.mxu0 0.0
    %556 = vmatpush1.msra.mxu0 0.0
    %557 = vmatprep.subr.mxu0 0.0
    %558 = vmatpush1.msra.mxu0 0.0
    %559 = vmatprep.subr.mxu0 0.0
    %560 = vmatpush1.msra.mxu0 0.0
    %561 = vmatprep.subr.mxu0 0.0
    %562 = vmatpush1.msra.mxu0 0.0
    %563 = vmatprep.subr.mxu0 0.0
    %564 = vmatpush1.msra.mxu0 0.0
    %565 = vmatprep.subr.mxu0 0.0
    %566 = vmatpush1.msra.mxu0 0.0
    %567 = vmatprep.subr.mxu0 0.0
    %568 = vmatpush1.msra.mxu0 0.0
    %569 = vmatprep.subr.mxu0 0.0
    %570 = vmatpush1.msra.mxu0 0.0
    %571 = vmatprep.subr.mxu0 0.0
    %572 = vmatpush1.msra.mxu0 0.0
    %573 = vmatprep.subr.mxu0 0.0
    %574 = vmatpush1.msra.mxu0 0.0
    %575 = vmatprep.subr.mxu0 0.0
    %576 = vmatpush1.msra.mxu0 0.0
    %577 = vmatprep.subr.mxu0 0.0
    %578 = vmatpush1.msra.mxu0 0.0
    %579 = vmatprep.subr.mxu0 0.0
    %580 = vmatpush1.msra.mxu0 %v521
    %581 = vmatprep.subr.mxu0 0.0
    %582 = vmatpush2.msra.mxu0 0.0
    %583 = vmatprep.subr.mxu0 0.0
    %584 = vmatpush2.msra.mxu0 0.0
    %585 = vmatprep.subr.mxu0 0.0
    %586 = vmatpush2.msra.mxu0 0.0
    %587 = vmatprep.subr.mxu0 0.0
    %588 = vmatpush2.msra.mxu0 0.0
    %589 = vmatprep.subr.mxu0 0.0
    %590 = vmatpush2.msra.mxu0 0.0
    %591 = vmatprep.subr.mxu0 0.0
    %592 = vmatpush2.msra.mxu0 0.0
    %593 = vmatprep.subr.mxu0 0.0
    %594 = vmatpush2.msra.mxu0 0.0
    %595 = vmatprep.subr.mxu0 0.0
    %596 = vmatpush2.msra.mxu0 0.0
    %597 = vmatprep.subr.mxu0 0.0
    %598 = vmatpush2.msra.mxu0 0.0
    %599 = vmatprep.subr.mxu0 0.0
    %600 = vmatpush2.msra.mxu0 0.0
    %601 = vmatprep.subr.mxu0 0.0
    %602 = vmatpush2.msra.mxu0 0.0
    %603 = vmatprep.subr.mxu0 0.0
    %604 = vmatpush2.msra.mxu0 0.0
    %605 = vmatprep.subr.mxu0 0.0
    %606 = vmatpush2.msra.mxu0 0.0
    %607 = vmatprep.subr.mxu0 0.0
    %608 = vmatpush2.msra.mxu0 0.0
    %609 = vmatprep.subr.mxu0 0.0
    %610 = vmatpush2.msra.mxu0 0.0
    %611 = vmatprep.subr.mxu0 0.0
    %612 = vmatpush2.msra.mxu0 0.0
    %613 = vmatprep.mubr.f32.mxu0 0.0
    %614 = vmatmul.mubr.f32.gmra.mxu0 %v544
    %v615 = vpop.f32.mrf.mxu0
    %v616 = vadd.f32 0.0, %v615
    %v617 = vpop.f32.mrf.mxu0
    %618 = vmatprep.mubr.f32.mxu0 0.0
    %619 = vmatmul.mubr.f32.gmra.mxu0 %v547
    %v620 = vpop.f32.mrf.mxu0
    %v621 = vadd.f32 0.0, %v620
    %v622 = vpop.f32.mrf.mxu0
    %623 = vdwg.mxu0
    %v624 = vmul.f32 %v616, 0.012499756
    %v625 = vmul.f32 %v621, 0.012499756
    %v626 = vadd.f32 %v540, %v624
    %v627 = vadd.f32 %v541, %v625
    %v628 = vmax.f32 %v626, 0.0
    %v629 = vmax.f32 %v627, 0.0
    %v631 = vsel %vm275, %v628, 0
    %v634 = vsel %vm275, %v629, 0
    %636 = vmatprep.subr.mxu0 0.0
    %637 = vmatpush1.msra.mxu0 0.0
    %638 = vmatprep.subr.mxu0 0.0
    %639 = vmatpush1.msra.mxu0 0.0
    %640 = vmatprep.subr.mxu0 0.0
    %641 = vmatpush1.msra.mxu0 0.0
    %642 = vmatprep.subr.mxu0 0.0
    %643 = vmatpush1.msra.mxu0 0.0
    %644 = vmatprep.subr.mxu0 0.0
    %645 = vmatpush1.msra.mxu0 0.0
    %646 = vmatprep.subr.mxu0 0.0
    %647 = vmatpush1.msra.mxu0 0.0
    %648 = vmatprep.subr.mxu0 0.0
    %649 = vmatpush1.msra.mxu0 0.0
    %650 = vmatprep.subr.mxu0 0.0
    %651 = vmatpush1.msra.mxu0 0.0
    %652 = vmatprep.subr.mxu0 0.0
    %653 = vmatpush1.msra.mxu0 %v529
    %654 = vmatprep.subr.mxu0 0.0
    %655 = vmatpush1.msra.mxu0 %v528
    %656 = vmatprep.subr.mxu0 0.0
    %657 = vmatpush1.msra.mxu0 %v527
    %658 = vmatprep.subr.mxu0 0.0
    %659 = vmatpush1.msra.mxu0 %v526
    %660 = vmatprep.subr.mxu0 0.0
    %661 = vmatpush1.msra.mxu0 %v525
    %662 = vmatprep.subr.mxu0 0.0
    %663 = vmatpush1.msra.mxu0 %v524
    %664 = vmatprep.subr.mxu0 0.0
    %665 = vmatpush1.msra.mxu0 %v523
    %666 = vmatprep.subr.mxu0 0.0
    %667 = vmatpush1.msra.mxu0 %v522
    %668 = vmatprep.subr.mxu0 0.0
    %669 = vmatpush2.msra.mxu0 0.0
    %670 = vmatprep.subr.mxu0 0.0
    %671 = vmatpush2.msra.mxu0 0.0
    %672 = vmatprep.subr.mxu0 0.0
    %673 = vmatpush2.msra.mxu0 0.0
    %674 = vmatprep.subr.mxu0 0.0
    %675 = vmatpush2.msra.mxu0 0.0
    %676 = vmatprep.subr.mxu0 0.0
    %677 = vmatpush2.msra.mxu0 0.0
    %678 = vmatprep.subr.mxu0 0.0
    %679 = vmatpush2.msra.mxu0 0.0
    %680 = vmatprep.subr.mxu0 0.0
    %681 = vmatpush2.msra.mxu0 0.0
    %682 = vmatprep.subr.mxu0 0.0
    %683 = vmatpush2.msra.mxu0 0.0
    %684 = vmatprep.subr.mxu0 0.0
    %685 = vmatpush2.msra.mxu0 0.0
    %686 = vmatprep.subr.mxu0 0.0
    %687 = vmatpush2.msra.mxu0 0.0
    %688 = vmatprep.subr.mxu0 0.0
    %689 = vmatpush2.msra.mxu0 0.0
    %690 = vmatprep.subr.mxu0 0.0
    %691 = vmatpush2.msra.mxu0 0.0
    %692 = vmatprep.subr.mxu0 0.0
    %693 = vmatpush2.msra.mxu0 0.0
    %694 = vmatprep.subr.mxu0 0.0
    %695 = vmatpush2.msra.mxu0 0.0
    %696 = vmatprep.subr.mxu0 0.0
    %697 = vmatpush2.msra.mxu0 0.0
    %698 = vmatprep.subr.mxu0 0.0
    %699 = vmatpush2.msra.mxu0 0.0
    %700 = vmatprep.mubr.f32.mxu0 0.0
    %701 = vmatmul.mubr.f32.gmra.mxu0 %v631
    %v702 = vpop.f32.mrf.mxu0
    %v703 = vadd.f32 0.0, %v702
    %v704 = vpop.f32.mrf.mxu0
    %705 = vmatprep.mubr.f32.mxu0 0.0
    %706 = vmatmul.mubr.f32.gmra.mxu0 %v634
    %v707 = vpop.f32.mrf.mxu0
    %v708 = vadd.f32 0.0, %v707
    %v709 = vpop.f32.mrf.mxu0
    %710 = vdwg.mxu0
    %v711 = vmul.f32 %v703, 0.44308704
    %v712 = vmul.f32 %v708, 0.44308704
    %v713 = vmul.f32 %v532, 0.11384321
    %v714 = vmul.f32 %v533, 0.11384321
    %v716 = vlaneseq
    %v717 = vshrl.u32 %v716, 7
    %v718 = vsub.s32 0, %v717
    %v719 = vrot.slane %v517, %v718
    %v721 = vadd.f32 %v713, %v719
    %v722 = vadd.f32 %v714, %v719
    %v723 = vadd.f32 %v711, %v721
    %v724 = vadd.f32 %v712, %v722
    %v726 = vlaneseq
    %v727 = vshrl.u32 %v726, 7
    %v728 = vsub.s32 0, %v727
    %v729 = vrot.slane %v512, %v728
    %v731 = vadd.f32 %v504, %v729
    %v732 = vadd.f32 %v505, %v729
    %v734 = vsel %vm542, %v723, 0
    %v737 = vsel %vm542, %v724, 0
    %739 = vmatprep.subr.mxu0 0.0
    %740 = vmatpush1.msra.mxu0 0.0
    %741 = vmatprep.subr.mxu0 0.0
    %742 = vmatpush1.msra.mxu0 0.0
    %743 = vmatprep.subr.mxu0 0.0
    %744 = vmatpush1.msra.mxu0 0.0
    %745 = vmatprep.subr.mxu0 0.0
    %746 = vmatpush1.msra.mxu0 0.0
    %747 = vmatprep.subr.mxu0 0.0
    %748 = vmatpush1.msra.mxu0 0.0
    %749 = vmatprep.subr.mxu0 0.0
    %750 = vmatpush1.msra.mxu0 0.0
    %751 = vmatprep.subr.mxu0 0.0
    %752 = vmatpush1.msra.mxu0 0.0
    %753 = vmatprep.subr.mxu0 0.0
    %754 = vmatpush1.msra.mxu0 0.0
    %755 = vmatprep.subr.mxu0 0.0
    %756 = vmatpush1.msra.mxu0 0.0
    %757 = vmatprep.subr.mxu0 0.0
    %758 = vmatpush1.msra.mxu0 0.0
    %759 = vmatprep.subr.mxu0 0.0
    %760 = vmatpush1.msra.mxu0 0.0
    %761 = vmatprep.subr.mxu0 0.0
    %762 = vmatpush1.msra.mxu0 0.0
    %763 = vmatprep.subr.mxu0 0.0
    %764 = vmatpush1.msra.mxu0 0.0
    %765 = vmatprep.subr.mxu0 0.0
    %766 = vmatpush1.msra.mxu0 0.0
    %767 = vmatprep.subr.mxu0 0.0
    %768 = vmatpush1.msra.mxu0 0.0
    %769 = vmatprep.subr.mxu0 0.0
    %770 = vmatpush1.msra.mxu0 %v521
    %771 = vmatprep.subr.mxu0 0.0
    %772 = vmatpush2.msra.mxu0 0.0
    %773 = vmatprep.subr.mxu0 0.0
    %774 = vmatpush2.msra.mxu0 0.0
    %775 = vmatprep.subr.mxu0 0.0
    %776 = vmatpush2.msra.mxu0 0.0
    %777 = vmatprep.subr.mxu0 0.0
    %778 = vmatpush2.msra.mxu0 0.0
    %779 = vmatprep.subr.mxu0 0.0
    %780 = vmatpush2.msra.mxu0 0.0
    %781 = vmatprep.subr.mxu0 0.0
    %782 = vmatpush2.msra.mxu0 0.0
    %783 = vmatprep.subr.mxu0 0.0
    %784 = vmatpush2.msra.mxu0 0.0
    %785 = vmatprep.subr.mxu0 0.0
    %786 = vmatpush2.msra.mxu0 0.0
    %787 = vmatprep.subr.mxu0 0.0
    %788 = vmatpush2.msra.mxu0 0.0
    %789 = vmatprep.subr.mxu0 0.0
    %790 = vmatpush2.msra.mxu0 0.0
    %791 = vmatprep.subr.mxu0 0.0
    %792 = vmatpush2.msra.mxu0 0.0
    %793 = vmatprep.subr.mxu0 0.0
    %794 = vmatpush2.msra.mxu0 0.0
    %795 = vmatprep.subr.mxu0 0.0
    %796 = vmatpush2.msra.mxu0 0.0
    %797 = vmatprep.subr.mxu0 0.0
    %798 = vmatpush2.msra.mxu0 0.0
    %799 = vmatprep.subr.mxu0 0.0
    %800 = vmatpush2.msra.mxu0 0.0
    %801 = vmatprep.subr.mxu0 0.0
    %802 = vmatpush2.msra.mxu0 0.0
    %803 = vmatprep.mubr.f32.mxu0 0.0
    %804 = vmatmul.mubr.f32.gmra.mxu0 %v734
    %v805 = vpop.f32.mrf.mxu0
    %v806 = vadd.f32 0.0, %v805
    %v807 = vpop.f32.mrf.mxu0
    %808 = vmatprep.mubr.f32.mxu0 0.0
    %809 = vmatmul.mubr.f32.gmra.mxu0 %v737
    %v810 = vpop.f32.mrf.mxu0
    %v811 = vadd.f32 0.0, %v810
    %v812 = vpop.f32.mrf.mxu0
    %813 = vdwg.mxu0
    %v814 = vmul.f32 %v806, 0.109668285
    %v815 = vmul.f32 %v811, 0.109668285
    %v816 = vadd.f32 %v731, %v814
    %v817 = vadd.f32 %v732, %v815
    %v818 = vmax.f32 %v816, 0.0
    %v819 = vmax.f32 %v817, 0.0
    %v821 = vsel %vm275, %v818, 0
    %v824 = vsel %vm275, %v819, 0
    %826 = vmatprep.subr.mxu0 0.0
    %827 = vmatpush1.msra.mxu0 0.0
    %828 = vmatprep.subr.mxu0 0.0
    %829 = vmatpush1.msra.mxu0 0.0
    %830 = vmatprep.subr.mxu0 0.0
    %831 = vmatpush1.msra.mxu0 0.0
    %832 = vmatprep.subr.mxu0 0.0
    %833 = vmatpush1.msra.mxu0 0.0
    %834 = vmatprep.subr.mxu0 0.0
    %835 = vmatpush1.msra.mxu0 0.0
    %836 = vmatprep.subr.mxu0 0.0
    %837 = vmatpush1.msra.mxu0 0.0
    %838 = vmatprep.subr.mxu0 0.0
    %839 = vmatpush1.msra.mxu0 0.0
    %840 = vmatprep.subr.mxu0 0.0
    %841 = vmatpush1.msra.mxu0 0.0
    %842 = vmatprep.subr.mxu0 0.0
    %843 = vmatpush1.msra.mxu0 %v529
    %844 = vmatprep.subr.mxu0 0.0
    %845 = vmatpush1.msra.mxu0 %v528
    %846 = vmatprep.subr.mxu0 0.0
    %847 = vmatpush1.msra.mxu0 %v527
    %848 = vmatprep.subr.mxu0 0.0
    %849 = vmatpush1.msra.mxu0 %v526
    %850 = vmatprep.subr.mxu0 0.0
    %851 = vmatpush1.msra.mxu0 %v525
    %852 = vmatprep.subr.mxu0 0.0
    %853 = vmatpush1.msra.mxu0 %v524
    %854 = vmatprep.subr.mxu0 0.0
    %855 = vmatpush1.msra.mxu0 %v523
    %856 = vmatprep.subr.mxu0 0.0
    %857 = vmatpush1.msra.mxu0 %v522
    %858 = vmatprep.subr.mxu0 0.0
    %859 = vmatpush2.msra.mxu0 0.0
    %860 = vmatprep.subr.mxu0 0.0
    %861 = vmatpush2.msra.mxu0 0.0
    %862 = vmatprep.subr.mxu0 0.0
    %863 = vmatpush2.msra.mxu0 0.0
    %864 = vmatprep.subr.mxu0 0.0
    %865 = vmatpush2.msra.mxu0 0.0
    %866 = vmatprep.subr.mxu0 0.0
    %867 = vmatpush2.msra.mxu0 0.0
    %868 = vmatprep.subr.mxu0 0.0
    %869 = vmatpush2.msra.mxu0 0.0
    %870 = vmatprep.subr.mxu0 0.0
    %871 = vmatpush2.msra.mxu0 0.0
    %872 = vmatprep.subr.mxu0 0.0
    %873 = vmatpush2.msra.mxu0 0.0
    %874 = vmatprep.subr.mxu0 0.0
    %875 = vmatpush2.msra.mxu0 0.0
    %876 = vmatprep.subr.mxu0 0.0
    %877 = vmatpush2.msra.mxu0 0.0
    %878 = vmatprep.subr.mxu0 0.0
    %879 = vmatpush2.msra.mxu0 0.0
    %880 = vmatprep.subr.mxu0 0.0
    %881 = vmatpush2.msra.mxu0 0.0
    %882 = vmatprep.subr.mxu0 0.0
    %883 = vmatpush2.msra.mxu0 0.0
    %884 = vmatprep.subr.mxu0 0.0
    %885 = vmatpush2.msra.mxu0 0.0
    %886 = vmatprep.subr.mxu0 0.0
    %887 = vmatpush2.msra.mxu0 0.0
    %888 = vmatprep.subr.mxu0 0.0
    %889 = vmatpush2.msra.mxu0 0.0
    %890 = vmatprep.mubr.f32.mxu0 0.0
    %891 = vmatmul.mubr.f32.gmra.mxu0 %v821
    %v892 = vpop.f32.mrf.mxu0
    %v893 = vadd.f32 0.0, %v892
    %v894 = vpop.f32.mrf.mxu0
    %895 = vmatprep.mubr.f32.mxu0 0.0
    %896 = vmatmul.mubr.f32.gmra.mxu0 %v824
    %v897 = vpop.f32.mrf.mxu0
    %v898 = vadd.f32 0.0, %v897
    %v899 = vpop.f32.mrf.mxu0
    %900 = vdwg.mxu0
    %v901 = vmul.f32 %v893, 0.4782463
    %v902 = vmul.f32 %v898, 0.4782463
    %v903 = vmul.f32 %v723, 0.044946484
    %v904 = vmul.f32 %v724, 0.044946484
    %v906 = vlaneseq
    %v907 = vshrl.u32 %v906, 7
    %v908 = vsub.s32 0, %v907
    %v909 = vrot.slane %v518, %v908
    %v911 = vadd.f32 %v903, %v909
    %v912 = vadd.f32 %v904, %v909
    %v913 = vadd.f32 %v901, %v911
    %v914 = vadd.f32 %v902, %v912
    %v916 = vlaneseq
    %v917 = vshrl.u32 %v916, 7
    %v918 = vsub.s32 0, %v917
    %v919 = vrot.slane %v514, %v918
    %v921 = vadd.f32 %v504, %v919
    %v922 = vadd.f32 %v505, %v919
    %v924 = vsel %vm542, %v913, 0
    %v927 = vsel %vm542, %v914, 0
    %929 = vmatprep.subr.mxu0 0.0
    %930 = vmatpush1.msra.mxu0 0.0
    %931 = vmatprep.subr.mxu0 0.0
    %932 = vmatpush1.msra.mxu0 0.0
    %933 = vmatprep.subr.mxu0 0.0
    %934 = vmatpush1.msra.mxu0 0.0
    %935 = vmatprep.subr.mxu0 0.0
    %936 = vmatpush1.msra.mxu0 0.0
    %937 = vmatprep.subr.mxu0 0.0
    %938 = vmatpush1.msra.mxu0 0.0
    %939 = vmatprep.subr.mxu0 0.0
    %940 = vmatpush1.msra.mxu0 0.0
    %941 = vmatprep.subr.mxu0 0.0
    %942 = vmatpush1.msra.mxu0 0.0
    %943 = vmatprep.subr.mxu0 0.0
    %944 = vmatpush1.msra.mxu0 0.0
    %945 = vmatprep.subr.mxu0 0.0
    %946 = vmatpush1.msra.mxu0 0.0
    %947 = vmatprep.subr.mxu0 0.0
    %948 = vmatpush1.msra.mxu0 0.0
    %949 = vmatprep.subr.mxu0 0.0
    %950 = vmatpush1.msra.mxu0 0.0
    %951 = vmatprep.subr.mxu0 0.0
    %952 = vmatpush1.msra.mxu0 0.0
    %953 = vmatprep.subr.mxu0 0.0
    %954 = vmatpush1.msra.mxu0 0.0
    %955 = vmatprep.subr.mxu0 0.0
    %956 = vmatpush1.msra.mxu0 0.0
    %957 = vmatprep.subr.mxu0 0.0
    %958 = vmatpush1.msra.mxu0 0.0
    %959 = vmatprep.subr.mxu0 0.0
    %960 = vmatpush1.msra.mxu0 %v521
    %961 = vmatprep.subr.mxu0 0.0
    %962 = vmatpush2.msra.mxu0 0.0
    %963 = vmatprep.subr.mxu0 0.0
    %964 = vmatpush2.msra.mxu0 0.0
    %965 = vmatprep.subr.mxu0 0.0
    %966 = vmatpush2.msra.mxu0 0.0
    %967 = vmatprep.subr.mxu0 0.0
    %968 = vmatpush2.msra.mxu0 0.0
    %969 = vmatprep.subr.mxu0 0.0
    %970 = vmatpush2.msra.mxu0 0.0
    %971 = vmatprep.subr.mxu0 0.0
    %972 = vmatpush2.msra.mxu0 0.0
    %973 = vmatprep.subr.mxu0 0.0
    %974 = vmatpush2.msra.mxu0 0.0
    %975 = vmatprep.subr.mxu0 0.0
    %976 = vmatpush2.msra.mxu0 0.0
    %977 = vmatprep.subr.mxu0 0.0
    %978 = vmatpush2.msra.mxu0 0.0
    %979 = vmatprep.subr.mxu0 0.0
    %980 = vmatpush2.msra.mxu0 0.0
    %981 = vmatprep.subr.mxu0 0.0
    %982 = vmatpush2.msra.mxu0 0.0
    %983 = vmatprep.subr.mxu0 0.0
    %984 = vmatpush2.msra.mxu0 0.0
    %985 = vmatprep.subr.mxu0 0.0
    %986 = vmatpush2.msra.mxu0 0.0
    %987 = vmatprep.subr.mxu0 0.0
    %988 = vmatpush2.msra.mxu0 0.0
    %989 = vmatprep.subr.mxu0 0.0
    %990 = vmatpush2.msra.mxu0 0.0
    %991 = vmatprep.subr.mxu0 0.0
    %992 = vmatpush2.msra.mxu0 0.0
    %993 = vmatprep.mubr.f32.mxu0 0.0
    %994 = vmatmul.mubr.f32.gmra.mxu0 %v924
    %v995 = vpop.f32.mrf.mxu0
    %v996 = vadd.f32 0.0, %v995
    %v997 = vpop.f32.mrf.mxu0
    %998 = vmatprep.mubr.f32.mxu0 0.0
    %999 = vmatmul.mubr.f32.gmra.mxu0 %v927
    %v1000 = vpop.f32.mrf.mxu0
    %v1001 = vadd.f32 0.0, %v1000
    %v1002 = vpop.f32.mrf.mxu0
    %1003 = vdwg.mxu0
    %v1004 = vmul.f32 %v996, 1.5877244
    %v1005 = vmul.f32 %v1001, 1.5877244
    %v1006 = vadd.f32 %v921, %v1004
    %v1007 = vadd.f32 %v922, %v1005
    %v1008 = vmax.f32 %v1006, 0.0
    %v1009 = vmax.f32 %v1007, 0.0
    %v1011 = vsel %vm275, %v1008, 0
    %v1014 = vsel %vm275, %v1009, 0
    %1016 = vmatprep.subr.mxu0 0.0
    %1017 = vmatpush1.msra.mxu0 0.0
    %1018 = vmatprep.subr.mxu0 0.0
    %1019 = vmatpush1.msra.mxu0 0.0
    %1020 = vmatprep.subr.mxu0 0.0
    %1021 = vmatpush1.msra.mxu0 0.0
    %1022 = vmatprep.subr.mxu0 0.0
    %1023 = vmatpush1.msra.mxu0 0.0
    %1024 = vmatprep.subr.mxu0 0.0
    %1025 = vmatpush1.msra.mxu0 0.0
    %1026 = vmatprep.subr.mxu0 0.0
    %1027 = vmatpush1.msra.mxu0 0.0
    %1028 = vmatprep.subr.mxu0 0.0
    %1029 = vmatpush1.msra.mxu0 0.0
    %1030 = vmatprep.subr.mxu0 0.0
    %1031 = vmatpush1.msra.mxu0 0.0
    %1032 = vmatprep.subr.mxu0 0.0
    %1033 = vmatpush1.msra.mxu0 %v529
    %1034 = vmatprep.subr.mxu0 0.0
    %1035 = vmatpush1.msra.mxu0 %v528
    %1036 = vmatprep.subr.mxu0 0.0
    %1037 = vmatpush1.msra.mxu0 %v527
    %1038 = vmatprep.subr.mxu0 0.0
    %1039 = vmatpush1.msra.mxu0 %v526
    %1040 = vmatprep.subr.mxu0 0.0
    %1041 = vmatpush1.msra.mxu0 %v525
    %1042 = vmatprep.subr.mxu0 0.0
    %1043 = vmatpush1.msra.mxu0 %v524
    %1044 = vmatprep.subr.mxu0 0.0
    %1045 = vmatpush1.msra.mxu0 %v523
    %1046 = vmatprep.subr.mxu0 0.0
    %1047 = vmatpush1.msra.mxu0 %v522
    %1048 = vmatprep.subr.mxu0 0.0
    %1049 = vmatpush2.msra.mxu0 0.0
    %1050 = vmatprep.subr.mxu0 0.0
    %1051 = vmatpush2.msra.mxu0 0.0
    %1052 = vmatprep.subr.mxu0 0.0
    %1053 = vmatpush2.msra.mxu0 0.0
    %1054 = vmatprep.subr.mxu0 0.0
    %1055 = vmatpush2.msra.mxu0 0.0
    %1056 = vmatprep.subr.mxu0 0.0
    %1057 = vmatpush2.msra.mxu0 0.0
    %1058 = vmatprep.subr.mxu0 0.0
    %1059 = vmatpush2.msra.mxu0 0.0
    %1060 = vmatprep.subr.mxu0 0.0
    %1061 = vmatpush2.msra.mxu0 0.0
    %1062 = vmatprep.subr.mxu0 0.0
    %1063 = vmatpush2.msra.mxu0 0.0
    %1064 = vmatprep.subr.mxu0 0.0
    %1065 = vmatpush2.msra.mxu0 0.0
    %1066 = vmatprep.subr.mxu0 0.0
    %1067 = vmatpush2.msra.mxu0 0.0
    %1068 = vmatprep.subr.mxu0 0.0
    %1069 = vmatpush2.msra.mxu0 0.0
    %1070 = vmatprep.subr.mxu0 0.0
    %1071 = vmatpush2.msra.mxu0 0.0
    %1072 = vmatprep.subr.mxu0 0.0
    %1073 = vmatpush2.msra.mxu0 0.0
    %1074 = vmatprep.subr.mxu0 0.0
    %1075 = vmatpush2.msra.mxu0 0.0
    %1076 = vmatprep.subr.mxu0 0.0
    %1077 = vmatpush2.msra.mxu0 0.0
    %1078 = vmatprep.subr.mxu0 0.0
    %1079 = vmatpush2.msra.mxu0 0.0
    %1080 = vmatprep.mubr.f32.mxu0 0.0
    %1081 = vmatmul.mubr.f32.gmra.mxu0 %v1011
    %v1082 = vpop.f32.mrf.mxu0
    %v1083 = vadd.f32 0.0, %v1082
    %v1084 = vpop.f32.mrf.mxu0
    %1085 = vmatprep.mubr.f32.mxu0 0.0
    %1086 = vmatmul.mubr.f32.gmra.mxu0 %v1014
    %v1087 = vpop.f32.mrf.mxu0
    %v1088 = vadd.f32 0.0, %v1087
    %v1089 = vpop.f32.mrf.mxu0
    %1090 = vdwg.mxu0
    %v1091 = vmul.f32 %v1083, 0.30325496
    %v1092 = vmul.f32 %v1088, 0.30325496
    %v1093 = vmul.f32 %v913, 0.63118273
    %v1094 = vmul.f32 %v914, 0.63118273
    %v1096 = vlaneseq
    %v1097 = vshrl.u32 %v1096, 7
    %v1098 = vsub.s32 0, %v1097
    %v1099 = vrot.slane %v519, %v1098
    %v1101 = vadd.f32 %v1093, %v1099
    %v1102 = vadd.f32 %v1094, %v1099
    %v1103 = vadd.f32 %v1091, %v1101
    %v1104 = vadd.f32 %v1092, %v1102
    %v1106 = vlaneseq
    %v1107 = vshrl.u32 %v1106, 7
    %v1108 = vsub.s32 0, %v1107
    %v1109 = vrot.slane %v516, %v1108
    %v1111 = vadd.f32 %v504, %v1109
    %v1112 = vadd.f32 %v505, %v1109
    %v1114 = vsel %vm542, %v1103, 0
    %v1117 = vsel %vm542, %v1104, 0
    %1119 = vmatprep.subr.mxu0 0.0
    %1120 = vmatpush1.msra.mxu0 0.0
    %1121 = vmatprep.subr.mxu0 0.0
    %1122 = vmatpush1.msra.mxu0 0.0
    %1123 = vmatprep.subr.mxu0 0.0
    %1124 = vmatpush1.msra.mxu0 0.0
    %1125 = vmatprep.subr.mxu0 0.0
    %1126 = vmatpush1.msra.mxu0 0.0
    %1127 = vmatprep.subr.mxu0 0.0
    %1128 = vmatpush1.msra.mxu0 0.0
    %1129 = vmatprep.subr.mxu0 0.0
    %1130 = vmatpush1.msra.mxu0 0.0
    %1131 = vmatprep.subr.mxu0 0.0
    %1132 = vmatpush1.msra.mxu0 0.0
    %1133 = vmatprep.subr.mxu0 0.0
    %1134 = vmatpush1.msra.mxu0 0.0
    %1135 = vmatprep.subr.mxu0 0.0
    %1136 = vmatpush1.msra.mxu0 0.0
    %1137 = vmatprep.subr.mxu0 0.0
    %1138 = vmatpush1.msra.mxu0 0.0
    %1139 = vmatprep.subr.mxu0 0.0
    %1140 = vmatpush1.msra.mxu0 0.0
    %1141 = vmatprep.subr.mxu0 0.0
    %1142 = vmatpush1.msra.mxu0 0.0
    %1143 = vmatprep.subr.mxu0 0.0
    %1144 = vmatpush1.msra.mxu0 0.0
    %1145 = vmatprep.subr.mxu0 0.0
    %1146 = vmatpush1.msra.mxu0 0.0
    %1147 = vmatprep.subr.mxu0 0.0
    %1148 = vmatpush1.msra.mxu0 0.0
    %1149 = vmatprep.subr.mxu0 0.0
    %1150 = vmatpush1.msra.mxu0 %v521
    %1151 = vmatprep.subr.mxu0 0.0
    %1152 = vmatpush2.msra.mxu0 0.0
    %1153 = vmatprep.subr.mxu0 0.0
    %1154 = vmatpush2.msra.mxu0 0.0
    %1155 = vmatprep.subr.mxu0 0.0
    %1156 = vmatpush2.msra.mxu0 0.0
    %1157 = vmatprep.subr.mxu0 0.0
    %1158 = vmatpush2.msra.mxu0 0.0
    %1159 = vmatprep.subr.mxu0 0.0
    %1160 = vmatpush2.msra.mxu0 0.0
    %1161 = vmatprep.subr.mxu0 0.0
    %1162 = vmatpush2.msra.mxu0 0.0
    %1163 = vmatprep.subr.mxu0 0.0
    %1164 = vmatpush2.msra.mxu0 0.0
    %1165 = vmatprep.subr.mxu0 0.0
    %1166 = vmatpush2.msra.mxu0 0.0
    %1167 = vmatprep.subr.mxu0 0.0
    %1168 = vmatpush2.msra.mxu0 0.0
    %1169 = vmatprep.subr.mxu0 0.0
    %1170 = vmatpush2.msra.mxu0 0.0
    %1171 = vmatprep.subr.mxu0 0.0
    %1172 = vmatpush2.msra.mxu0 0.0
    %1173 = vmatprep.subr.mxu0 0.0
    %1174 = vmatpush2.msra.mxu0 0.0
    %1175 = vmatprep.subr.mxu0 0.0
    %1176 = vmatpush2.msra.mxu0 0.0
    %1177 = vmatprep.subr.mxu0 0.0
    %1178 = vmatpush2.msra.mxu0 0.0
    %1179 = vmatprep.subr.mxu0 0.0
    %1180 = vmatpush2.msra.mxu0 0.0
    %1181 = vmatprep.subr.mxu0 0.0
    %1182 = vmatpush2.msra.mxu0 0.0
    %1183 = vmatprep.mubr.f32.mxu0 0.0
    %1184 = vmatmul.mubr.f32.gmra.mxu0 %v1114
    %v1185 = vpop.f32.mrf.mxu0
    %v1186 = vadd.f32 0.0, %v1185
    %v1187 = vpop.f32.mrf.mxu0
    %1188 = vmatprep.mubr.f32.mxu0 0.0
    %1189 = vmatmul.mubr.f32.gmra.mxu0 %v1117
    %v1190 = vpop.f32.mrf.mxu0
    %v1191 = vadd.f32 0.0, %v1190
    %v1192 = vpop.f32.mrf.mxu0
    %1193 = vdwg.mxu0
    %v1194 = vmul.f32 %v1186, 1.999996
    %v1195 = vmul.f32 %v1191, 1.999996
    %v1196 = vadd.f32 %v1111, %v1194
    %v1197 = vadd.f32 %v1112, %v1195
    %v1198 = vmax.f32 %v1196, 0.0
    %v1199 = vmax.f32 %v1197, 0.0
    %v1201 = vsel %vm275, %v1198, 0
    %v1204 = vsel %vm275, %v1199, 0
    %1206 = vmatprep.subr.mxu0 0.0
    %1207 = vmatpush1.msra.mxu0 0.0
    %1208 = vmatprep.subr.mxu0 0.0
    %1209 = vmatpush1.msra.mxu0 0.0
    %1210 = vmatprep.subr.mxu0 0.0
    %1211 = vmatpush1.msra.mxu0 0.0
    %1212 = vmatprep.subr.mxu0 0.0
    %1213 = vmatpush1.msra.mxu0 0.0
    %1214 = vmatprep.subr.mxu0 0.0
    %1215 = vmatpush1.msra.mxu0 0.0
    %1216 = vmatprep.subr.mxu0 0.0
    %1217 = vmatpush1.msra.mxu0 0.0
    %1218 = vmatprep.subr.mxu0 0.0
    %1219 = vmatpush1.msra.mxu0 0.0
    %1220 = vmatprep.subr.mxu0 0.0
    %1221 = vmatpush1.msra.mxu0 0.0
    %1222 = vmatprep.subr.mxu0 0.0
    %1223 = vmatpush1.msra.mxu0 %v529
    %1224 = vmatprep.subr.mxu0 0.0
    %1225 = vmatpush1.msra.mxu0 %v528
    %1226 = vmatprep.subr.mxu0 0.0
    %1227 = vmatpush1.msra.mxu0 %v527
    %1228 = vmatprep.subr.mxu0 0.0
    %1229 = vmatpush1.msra.mxu0 %v526
    %1230 = vmatprep.subr.mxu0 0.0
    %1231 = vmatpush1.msra.mxu0 %v525
    %1232 = vmatprep.subr.mxu0 0.0
    %1233 = vmatpush1.msra.mxu0 %v524
    %1234 = vmatprep.subr.mxu0 0.0
    %1235 = vmatpush1.msra.mxu0 %v523
    %1236 = vmatprep.subr.mxu0 0.0
    %1237 = vmatpush1.msra.mxu0 %v522
    %1238 = vmatprep.subr.mxu0 0.0
    %1239 = vmatpush2.msra.mxu0 0.0
    %1240 = vmatprep.subr.mxu0 0.0
    %1241 = vmatpush2.msra.mxu0 0.0
    %1242 = vmatprep.subr.mxu0 0.0
    %1243 = vmatpush2.msra.mxu0 0.0
    %1244 = vmatprep.subr.mxu0 0.0
    %1245 = vmatpush2.msra.mxu0 0.0
    %1246 = vmatprep.subr.mxu0 0.0
    %1247 = vmatpush2.msra.mxu0 0.0
    %1248 = vmatprep.subr.mxu0 0.0
    %1249 = vmatpush2.msra.mxu0 0.0
    %1250 = vmatprep.subr.mxu0 0.0
    %1251 = vmatpush2.msra.mxu0 0.0
    %1252 = vmatprep.subr.mxu0 0.0
    %1253 = vmatpush2.msra.mxu0 0.0
    %1254 = vmatprep.subr.mxu0 0.0
    %1255 = vmatpush2.msra.mxu0 0.0
    %1256 = vmatprep.subr.mxu0 0.0
    %1257 = vmatpush2.msra.mxu0 0.0
    %1258 = vmatprep.subr.mxu0 0.0
    %1259 = vmatpush2.msra.mxu0 0.0
    %1260 = vmatprep.subr.mxu0 0.0
    %1261 = vmatpush2.msra.mxu0 0.0
    %1262 = vmatprep.subr.mxu0 0.0
    %1263 = vmatpush2.msra.mxu0 0.0
    %1264 = vmatprep.subr.mxu0 0.0
    %1265 = vmatpush2.msra.mxu0 0.0
    %1266 = vmatprep.subr.mxu0 0.0
    %1267 = vmatpush2.msra.mxu0 0.0
    %1268 = vmatprep.subr.mxu0 0.0
    %1269 = vmatpush2.msra.mxu0 0.0
    %1270 = vmatprep.mubr.f32.mxu0 0.0
    %1271 = vmatmul.mubr.f32.gmra.mxu0 %v1201
    %v1272 = vpop.f32.mrf.mxu0
    %v1273 = vadd.f32 0.0, %v1272
    %v1274 = vpop.f32.mrf.mxu0
    %1275 = vmatprep.mubr.f32.mxu0 0.0
    %1276 = vmatmul.mubr.f32.gmra.mxu0 %v1204
    %v1277 = vpop.f32.mrf.mxu0
    %v1278 = vadd.f32 0.0, %v1277
    %v1279 = vpop.f32.mrf.mxu0
    %1280 = vdwg.mxu0
    %v1281 = vmul.f32 %v1273, 0.000999998
    %v1282 = vmul.f32 %v1278, 0.000999998
    %v1283 = vmul.f32 %v1103, 0.999996
    %v1284 = vmul.f32 %v1104, 0.999996
    %v1286 = vlaneseq
    %v1287 = vshrl.u32 %v1286, 7
    %v1288 = vsub.s32 0, %v1287
    %v1289 = vrot.slane %v520, %v1288
    %v1291 = vadd.f32 %v1283, %v1289
    %v1292 = vadd.f32 %v1284, %v1289
    %v1293 = vadd.f32 %v1281, %v1291
    %v1294 = vadd.f32 %v1282, %v1292
    %1295 = vst.msk [vmem:[#allocation3] sm:$0xff] %vm542, %v1293
    %1296 = vst.msk [vmem:[#allocation3 + $0x8] sm:$0xff] %vm542, %v1294
    // Predicated region
    $region42: #{diffusion_action_decoder_forward.1} parent=1 // pred_check
      _
    $region43: #{diffusion_action_decoder_forward.1} parent=1 // pred_check_branch
      %1298 = sbr.rel (0) target = $region45
    $region44: #{diffusion_action_decoder_forward.1} parent=1 // pred_region
      %s1300 = ssub.s32 256, 256
      %1301 = vsyncadd [#allocation4], %s1300
      %s1302 = sshll.u32 [#allocation3], 4
      %s1303 = int_to_ptr.vmem [resolvable:$true] %s1302
      %1308 = dma.vmem_to_hbm [thread:$0]  %s1303, 256, %s10, [#allocation4], 128, 128, 8
    $region45: #{diffusion_action_decoder_forward.1} parent=1 // pred_fallthru
      _
    // Predicated region
    $region46: #{diffusion_action_decoder_forward.1} parent=1 // pred_check
      _
    $region47: #{diffusion_action_decoder_forward.1} parent=1 // pred_check_branch
      %1310 = sbr.rel (0) target = $region49
    $region48: #{diffusion_action_decoder_forward.1} parent=1 // pred_region
      %1311 = dma.done [#allocation4], 256
    $region49: #{diffusion_action_decoder_forward.1} parent=1 // pred_fallthru
      _
    %1312 = vsyncpa [#allocation4], 1

</llo_original>
